<compile_context>
chip_gen: v7x
topology: tpu7x:2x2x1
jax: 0.10.0
libtpu: 0.0.40
codegen_flags: <defaults>
</compile_context>

<pallas_src>
import jax
import jax.numpy as jnp
import numpy as np
from jax import lax
from jax.experimental import pallas as pl
from jax.experimental.pallas import tpu as pltpu


def _bilstm_kernel(x_ref, mask_ref, wih_ref, whh_ref, b_ref, h0_ref, c0_ref,
                   out_ref, hn_ref, cn_ref,
                   xg_scr, efwd_scr, ebwd_scr):
    """Bidirectional single-layer LSTM, fully VMEM-resident, fused directions.

    x_ref    : (T*Bp, 2I)  bf16  [x(t) | x(T-1-t)] time-major, batch padded to Bp
    mask_ref : (T, Bp, 2H) f32   [fwd mask at t=s | bwd mask at t=T-1-s]
    wih_ref  : (2I, 8H)    bf16  block-diag input weights, gate-major columns
                                  [i_f i_b | f_f f_b | g_f g_b | o_f o_b]
    whh_ref  : (2H, 8H)    bf16  block-diag recurrent weights, same column layout
    b_ref    : (1, 8H)     f32   combined bias (b_ih + b_hh), same column layout
    h0_ref   : (Bp, 2H)    f32   initial hidden state  [h0_f | h0_b]
    c0_ref   : (Bp, 2H)    f32   initial cell state    [c0_f | c0_b]
    out_ref  : (T, Bp, H)  f32   sum of fwd + bwd direction outputs
    hn_ref   : (2, Bp, H)  f32   final hidden state per direction
    cn_ref   : (2, Bp, H)  f32   final cell state per direction
    """
    T, Bp, H = out_ref.shape
    H2 = 2 * H
    G = 8 * H

    # ---- (1) Hoisted input projection: one MXU matmul for all timesteps and
    #      both directions (8H-wide, bias folded in).  The bwd half of x is
    #      already time-reversed by the wrapper, so xg_scr[s] holds the fwd
    #      pre-activations at time s and the bwd pre-activations at time T-1-s.
    xproj = jnp.dot(x_ref[...], wih_ref[...],
                    preferred_element_type=jnp.float32)             # (T*Bp, 8H)
    xg_scr[...] = (xproj + b_ref[...]).reshape(T, Bp, G)

    # Lane mask selecting the "g" gate block (gate-major layout => lanes [4H,6H)).
    # Activations are computed full-width (1 tanh + 1 sigmoid EUP pass + 1 select)
    # instead of eight sub-vreg slices feeding the EUP.
    lane = lax.broadcasted_iota(jnp.int32, (Bp, G), 1)
    g_lane = (lane >= 4 * H) & (lane < 6 * H)

    whh = whh_ref[...]                                              # (2H, 8H) bf16

    # ---- (2) Fused fwd/bwd recurrence: one matmul + one activation pass per
    #      step, h/c carried in registers (no per-step VMEM round-trip).
    def step(s, carry):
        h, c = carry                                                # (Bp, 2H) f32
        m = mask_ref[s] != 0.0                                      # (Bp, 2H) bool
        gates = xg_scr[s] + jnp.dot(h.astype(jnp.bfloat16), whh,
                                    preferred_element_type=jnp.float32)
        act = jnp.where(g_lane, jnp.tanh(gates), jax.nn.sigmoid(gates))
        i_g = act[:, 0:H2]
        f_g = act[:, H2:2 * H2]
        g_g = act[:, 2 * H2:3 * H2]
        o_g = act[:, 3 * H2:4 * H2]
        c_new = f_g * c + i_g * g_g
        h_new = o_g * jnp.tanh(c_new)
        # Packed-sequence semantics: steps past a sequence's length neither
        # update the state nor emit output (pad_packed_sequence yields zeros).
        e = jnp.where(m, h_new, 0.0)
        efwd_scr[s] = e[:, 0:H]
        ebwd_scr[T - 1 - s] = e[:, H:H2]
        return jnp.where(m, h_new, h), jnp.where(m, c_new, c)

    h_fin, c_fin = lax.fori_loop(0, T, step, (h0_ref[...], c0_ref[...]),
                                 unroll=True)

    hn_ref[0] = h_fin[:, 0:H]
    hn_ref[1] = h_fin[:, H:H2]
    cn_ref[0] = c_fin[:, 0:H]
    cn_ref[1] = c_fin[:, H:H2]
    # ---- (3) One bulk store of the summed direction halves.
    out_ref[...] = efwd_scr[...] + ebwd_scr[...]


def _block_diag_gate_major(w_f, w_b, H):
    """Combine per-direction (R, 4H) weights into a block-diagonal (2R, 8H)
    matrix with gate-major interleaved columns [i_f i_b | f_f f_b | g_f g_b | o_f o_b]."""
    R = w_f.shape[0]
    wf4 = w_f.reshape(R, 4, H)
    wb4 = w_b.reshape(R, 4, H)
    z = jnp.zeros((R, 4, H), w_f.dtype)
    top = jnp.stack([wf4, z], axis=2)        # forward rows -> direction-0 columns
    bot = jnp.stack([z, wb4], axis=2)        # backward rows -> direction-1 columns
    return jnp.concatenate([top, bot], axis=0).reshape(2 * R, 8 * H)


@jax.jit
def lstm_forward(x, lens, params):
    """Wrapper: pads/bf16-casts inputs, builds masks & fused weights, calls the kernel."""
    T, B, I = x.shape
    H = params["h0"].shape[-1]
    Bp = max(8, ((B + 7) // 8) * 8)          # pad batch to the f32 sublane count

    # Input: [x(t) | x(T-1-t)] so the bwd direction's projection is already
    # time-aligned with the interleaved recurrence.
    x_p = jnp.pad(x.astype(jnp.float32), ((0, 0), (0, Bp - B), (0, 0)))
    x_cat = jnp.concatenate([x_p, x_p[::-1]], axis=-1)               # (T, Bp, 2I)
    x2d = x_cat.reshape(T * Bp, 2 * I).astype(jnp.bfloat16)

    # Mask: fwd half at t=s, bwd half at t=T-1-s, broadcast over H lanes each.
    t_idx = jnp.arange(T)
    m_f = (t_idx[:, None] < lens[None, :]).astype(jnp.float32)       # (T, B)
    m_b = ((T - 1 - t_idx)[:, None] < lens[None, :]).astype(jnp.float32)
    m_f = jnp.pad(m_f, ((0, 0), (0, Bp - B)))
    m_b = jnp.pad(m_b, ((0, 0), (0, Bp - B)))
    mask_comb = jnp.concatenate(
        [jnp.broadcast_to(m_f[:, :, None], (T, Bp, H)),
         jnp.broadcast_to(m_b[:, :, None], (T, Bp, H))], axis=-1)    # (T, Bp, 2H)

    # Fused block-diagonal weights / bias (gate-major interleaved columns).
    wih_big = _block_diag_gate_major(params["wih"][0], params["wih"][1], H)
    wih_big = wih_big.astype(jnp.bfloat16)                           # (2I, 8H)
    whh_big = _block_diag_gate_major(params["whh"][0], params["whh"][1], H)
    whh_big = whh_big.astype(jnp.bfloat16)                           # (2H, 8H)
    b_big = jnp.stack([params["b"][0, 0].reshape(4, H),
                       params["b"][1, 0].reshape(4, H)], axis=1).reshape(1, 8 * H)

    # NOTE (intentional): the PyTorch module passes initial_state=(c0, h0) where
    # nn.LSTM expects (h_0, c_0).  Reproduce that swap exactly -- do NOT "fix" it.
    h_used = params["c0"].astype(jnp.float32)                        # (2, 1, H)
    c_used = params["h0"].astype(jnp.float32)
    h0_comb = jnp.broadcast_to(
        jnp.concatenate([h_used[0], h_used[1]], axis=-1), (Bp, 2 * H))
    c0_comb = jnp.broadcast_to(
        jnp.concatenate([c_used[0], c_used[1]], axis=-1), (Bp, 2 * H))

    vmem = pl.BlockSpec(memory_space=pltpu.MemorySpace.VMEM)
    out_shapes = (
        jax.ShapeDtypeStruct((T, Bp, H), jnp.float32),
        jax.ShapeDtypeStruct((2, Bp, H), jnp.float32),
        jax.ShapeDtypeStruct((2, Bp, H), jnp.float32),
    )
    out, h_n, c_n = pl.pallas_call(
        _bilstm_kernel,
        out_shape=out_shapes,
        in_specs=[vmem] * 7,
        out_specs=(vmem, vmem, vmem),
        scratch_shapes=[
            pltpu.VMEM((T, Bp, 8 * H), jnp.float32),   # fused input pre-activations
            pltpu.VMEM((T, Bp, H), jnp.float32),       # fwd emissions
            pltpu.VMEM((T, Bp, H), jnp.float32),       # bwd emissions
        ],
    )(x2d, mask_comb, wih_big, whh_big, b_big, h0_comb, c0_comb)
    return out[:, :B], (h_n[:, :B], c_n[:, :B])


def _bf16_round(a):
    """Round-to-nearest-even to bfloat16 precision, returned as float32 numpy."""
    return np.asarray(jnp.asarray(a, jnp.float32).astype(jnp.bfloat16).astype(jnp.float32))


def lstm_reference(x, lens, params):
    """Pure NumPy reference with identical semantics (matmul operands rounded to bf16)."""
    lens = np.asarray(lens)
    x = _bf16_round(x)                         # (T, B, I)
    wih = _bf16_round(params["wih"])           # (2, I, 4H)
    whh = _bf16_round(params["whh"])           # (2, H, 4H)
    b = np.asarray(params["b"], np.float32)    # (2, 1, 4H)
    T, B, _ = x.shape
    H = np.asarray(params["h0"]).shape[-1]
    h_init = np.broadcast_to(np.asarray(params["c0"], np.float32), (2, B, H))
    c_init = np.broadcast_to(np.asarray(params["h0"], np.float32), (2, B, H))

    def sigmoid(z):
        return 1.0 / (1.0 + np.exp(-z))

    out = np.zeros((T, B, H), np.float32)
    hn = np.zeros((2, B, H), np.float32)
    cn = np.zeros((2, B, H), np.float32)
    for d in range(2):
        h = h_init[d].copy()
        c = c_init[d].copy()
        ts = range(T) if d == 0 else range(T - 1, -1, -1)
        for t in ts:
            m = (t < lens).astype(np.float32)[:, None]
            xg = x[t] @ wih[d] + b[d]                      # hoisted input projection
            gates = xg + _bf16_round(h) @ whh[d]           # recurrent projection
            i_g = sigmoid(gates[:, :H])
            f_g = sigmoid(gates[:, H:2 * H])
            g_g = np.tanh(gates[:, 2 * H:3 * H])
            o_g = sigmoid(gates[:, 3 * H:])
            c_new = f_g * c + i_g * g_g
            h_new = o_g * np.tanh(c_new)
            c = m * c_new + (1 - m) * c
            h = m * h_new + (1 - m) * h
            out[t] += m * h_new
        hn[d] = h
        cn[d] = c
    return out, hn, cn


def init_params(key, input_size, hidden_size):
    """Deterministic synthetic LSTM parameters (PyTorch gate order i,f,g,o)."""
    ks = jax.random.split(key, 8)
    s = 1.0 / np.sqrt(hidden_size)
    wih = jax.random.uniform(ks[0], (2, input_size, 4 * hidden_size),
                             minval=-s, maxval=s, dtype=jnp.float32)
    whh = jax.random.uniform(ks[1], (2, hidden_size, 4 * hidden_size),
                             minval=-s, maxval=s, dtype=jnp.float32)
    b_ih = jax.random.uniform(ks[2], (2, 1, 4 * hidden_size),
                              minval=-s, maxval=s, dtype=jnp.float32)
    b_hh = jax.random.uniform(ks[3], (2, 1, 4 * hidden_size),
                              minval=-s, maxval=s, dtype=jnp.float32)
    h0 = jax.random.normal(ks[4], (2, 1, hidden_size), dtype=jnp.float32)
    c0 = jax.random.normal(ks[5], (2, 1, hidden_size), dtype=jnp.float32)
    return {"wih": wih, "whh": whh, "b": b_ih + b_hh, "h0": h0, "c0": c0}


if __name__ == "__main__":
    INPUT_SIZE = 16
    HIDDEN = 32
    T = 8       # max sequence length
    B = 2       # batch size

    key = jax.random.PRNGKey(0)
    k_param, k_x = jax.random.split(key)
    params = init_params(k_param, INPUT_SIZE, HIDDEN)

    x = jax.random.normal(k_x, (T, B, INPUT_SIZE), dtype=jnp.float32)
    lens = jnp.array([T, 5], dtype=jnp.int32)   # variable lengths (packed-seq behaviour)

    out, (h_n, c_n) = jax.block_until_ready(lstm_forward(x, lens, params))

    out_ref, hn_ref, cn_ref = lstm_reference(np.asarray(x), lens, params)
    np.testing.assert_allclose(np.asarray(out), out_ref, rtol=1e-4, atol=1e-4)
    np.testing.assert_allclose(np.asarray(h_n), hn_ref, rtol=1e-4, atol=1e-4)
    np.testing.assert_allclose(np.asarray(c_n), cn_ref, rtol=1e-4, atol=1e-4)

    print("KERNEL_OK")
</pallas_src>

<mosaic_0001>
module attributes {stable_mosaic.version = 11 : i64} {
  func.func @_bilstm_kernel(%arg0: memref<64x32xbf16, #tpu.memory_space<vmem>>, %arg1: memref<8x8x64xf32, #tpu.memory_space<vmem>>, %arg2: memref<32x256xbf16, #tpu.memory_space<vmem>>, %arg3: memref<64x256xbf16, #tpu.memory_space<vmem>>, %arg4: memref<1x256xf32, #tpu.memory_space<vmem>>, %arg5: memref<8x64xf32, #tpu.memory_space<vmem>>, %arg6: memref<8x64xf32, #tpu.memory_space<vmem>>, %arg7: memref<8x8x32xf32, #tpu.memory_space<vmem>>, %arg8: memref<2x8x32xf32, #tpu.memory_space<vmem>>, %arg9: memref<2x8x32xf32, #tpu.memory_space<vmem>>, %arg10: memref<8x8x256xf32, #tpu.memory_space<vmem>>, %arg11: memref<8x8x32xf32, #tpu.memory_space<vmem>>, %arg12: memref<8x8x32xf32, #tpu.memory_space<vmem>>) attributes {dimension_semantics = [], scalar_prefetch = 0 : i64, scratch_operands = 3 : i64, tpu.core_type = #tpu.core_type<tc>} {
    %c0 = arith.constant 0 : index
    %c0_0 = arith.constant 0 : index
    %0 = vector.load %arg0[%c0, %c0_0] : memref<64x32xbf16, #tpu.memory_space<vmem>>, vector<64x32xbf16>
    %c0_1 = arith.constant 0 : index
    %c0_2 = arith.constant 0 : index
    %1 = vector.load %arg2[%c0_1, %c0_2] : memref<32x256xbf16, #tpu.memory_space<vmem>>, vector<32x256xbf16>
    %cst = arith.constant dense<0.000000e+00> : vector<64x256xf32>
    %2 = tpu.matmul %0, %1, %cst {dimension_numbers = #tpu.dot_dimension_numbers<[1], [0], [0], [1], [0, 0, 1, 1], [], []>} : vector<64x32xbf16>, vector<32x256xbf16>, vector<64x256xf32> -> vector<64x256xf32>
    %c0_3 = arith.constant 0 : index
    %c0_4 = arith.constant 0 : index
    %3 = vector.load %arg4[%c0_3, %c0_4] : memref<1x256xf32, #tpu.memory_space<vmem>>, vector<1x256xf32>
    %4 = vector.broadcast %3 : vector<1x256xf32> to vector<64x256xf32>
    %5 = arith.addf %2, %4 : vector<64x256xf32>
    %6 = vector.shape_cast %5 : vector<64x256xf32> to vector<8x8x256xf32>
    %c0_5 = arith.constant 0 : index
    %c0_6 = arith.constant 0 : index
    %c0_7 = arith.constant 0 : index
    %7 = vector.load %arg10[%c0_5, %c0_6, %c0_7] : memref<8x8x256xf32, #tpu.memory_space<vmem>>, vector<8x8x256xf32>
    tpu.vector_store %arg10[%c0_5, %c0_6, %c0_7], %6 {strides = array<i32>} : memref<8x8x256xf32, #tpu.memory_space<vmem>>, vector<8x8x256xf32>,
    %8 = tpu.iota {dimensions = array<i32: 1>} : vector<8x256xi32>
    %c128_i32 = arith.constant 128 : i32
    %9 = vector.broadcast %c128_i32 : i32 to vector<8x256xi32>
    %10 = arith.cmpi sge, %8, %9 : vector<8x256xi32>
    %c192_i32 = arith.constant 192 : i32
    %11 = vector.broadcast %c192_i32 : i32 to vector<8x256xi32>
    %12 = arith.cmpi slt, %8, %11 : vector<8x256xi32>
    %13 = arith.andi %10, %12 : vector<8x256xi1>
    %c0_8 = arith.constant 0 : index
    %c0_9 = arith.constant 0 : index
    %14 = vector.load %arg3[%c0_8, %c0_9] : memref<64x256xbf16, #tpu.memory_space<vmem>>, vector<64x256xbf16>
    %c0_10 = arith.constant 0 : index
    %c0_11 = arith.constant 0 : index
    %15 = vector.load %arg5[%c0_10, %c0_11] : memref<8x64xf32, #tpu.memory_space<vmem>>, vector<8x64xf32>
    %c0_12 = arith.constant 0 : index
    %c0_13 = arith.constant 0 : index
    %16 = vector.load %arg6[%c0_12, %c0_13] : memref<8x64xf32, #tpu.memory_space<vmem>>, vector<8x64xf32>
    %c0_i32 = arith.constant 0 : i32
    %17 = arith.index_cast %c0_i32 : i32 to index
    %c0_14 = arith.constant 0 : index
    %c0_15 = arith.constant 0 : index
    %18 = vector.load %arg1[%17, %c0_14, %c0_15] : memref<8x8x64xf32, #tpu.memory_space<vmem>>, vector<1x8x64xf32>
    %19 = vector.shape_cast %18 : vector<1x8x64xf32> to vector<8x64xf32>
    %cst_16 = arith.constant 0.000000e+00 : f32
    %20 = vector.broadcast %cst_16 : f32 to vector<8x64xf32>
    %21 = arith.cmpf one, %19, %20 : vector<8x64xf32>
    %22 = arith.index_cast %c0_i32 : i32 to index
    %c0_17 = arith.constant 0 : index
    %c0_18 = arith.constant 0 : index
    %23 = vector.load %arg10[%22, %c0_17, %c0_18] : memref<8x8x256xf32, #tpu.memory_space<vmem>>, vector<1x8x256xf32>
    %24 = vector.shape_cast %23 : vector<1x8x256xf32> to vector<8x256xf32>
    %25 = arith.truncf %15 : vector<8x64xf32> to vector<8x64xbf16>
    %cst_19 = arith.constant dense<0.000000e+00> : vector<8x256xf32>
    %26 = tpu.matmul %25, %14, %cst_19 {dimension_numbers = #tpu.dot_dimension_numbers<[1], [0], [0], [1], [0, 0, 1, 1], [], []>} : vector<8x64xbf16>, vector<64x256xbf16>, vector<8x256xf32> -> vector<8x256xf32>
    %27 = arith.addf %24, %26 : vector<8x256xf32>
    %28 = math.tanh %27 : vector<8x256xf32>
    %29 = arith.negf %27 : vector<8x256xf32>
    %30 = math.exp %29 : vector<8x256xf32>
    %cst_20 = arith.constant 1.000000e+00 : f32
    %31 = vector.broadcast %cst_20 : f32 to vector<8x256xf32>
    %32 = arith.addf %31, %30 : vector<8x256xf32>
    %33 = arith.divf %31, %32 : vector<8x256xf32>
    %34 = arith.select %13, %28, %33 : vector<8x256xi1>, vector<8x256xf32>
    %35 = vector.extract_strided_slice %34 {offsets = [0, 0], sizes = [8, 64], strides = [1, 1]} : vector<8x256xf32> to vector<8x64xf32>
    %36 = vector.extract_strided_slice %34 {offsets = [0, 64], sizes = [8, 64], strides = [1, 1]} : vector<8x256xf32> to vector<8x64xf32>
    %37 = vector.extract_strided_slice %34 {offsets = [0, 128], sizes = [8, 64], strides = [1, 1]} : vector<8x256xf32> to vector<8x64xf32>
    %38 = vector.extract_strided_slice %34 {offsets = [0, 192], sizes = [8, 64], strides = [1, 1]} : vector<8x256xf32> to vector<8x64xf32>
    %39 = arith.mulf %36, %16 : vector<8x64xf32>
    %40 = arith.mulf %35, %37 : vector<8x64xf32>
    %41 = arith.addf %39, %40 : vector<8x64xf32>
    %42 = math.tanh %41 : vector<8x64xf32>
    %43 = arith.mulf %38, %42 : vector<8x64xf32>
    %cst_21 = arith.constant 0.000000e+00 : f32
    %44 = vector.broadcast %cst_21 : f32 to vector<8x64xf32>
    %45 = arith.select %21, %43, %44 : vector<8x64xi1>, vector<8x64xf32>
    %46 = vector.extract_strided_slice %45 {offsets = [0, 0], sizes = [8, 32], strides = [1, 1]} : vector<8x64xf32> to vector<8x32xf32>
    %47 = arith.index_cast %c0_i32 : i32 to index
    %c0_22 = arith.constant 0 : index
    %c0_23 = arith.constant 0 : index
    %48 = vector.load %arg11[%47, %c0_22, %c0_23] : memref<8x8x32xf32, #tpu.memory_space<vmem>>, vector<1x8x32xf32>
    %49 = vector.shape_cast %48 : vector<1x8x32xf32> to vector<8x32xf32>
    %50 = vector.shape_cast %46 : vector<8x32xf32> to vector<1x8x32xf32>
    tpu.vector_store %arg11[%47, %c0_22, %c0_23], %50 {strides = array<i32>} : memref<8x8x32xf32, #tpu.memory_space<vmem>>, vector<1x8x32xf32>,
    %51 = vector.extract_strided_slice %45 {offsets = [0, 32], sizes = [8, 32], strides = [1, 1]} : vector<8x64xf32> to vector<8x32xf32>
    %c7_i32 = arith.constant 7 : i32
    %52 = arith.subi %c7_i32, %c0_i32 : i32
    %53 = arith.index_cast %52 : i32 to index
    %c0_24 = arith.constant 0 : index
    %c0_25 = arith.constant 0 : index
    %54 = vector.load %arg12[%53, %c0_24, %c0_25] : memref<8x8x32xf32, #tpu.memory_space<vmem>>, vector<1x8x32xf32>
    %55 = vector.shape_cast %54 : vector<1x8x32xf32> to vector<8x32xf32>
    %56 = vector.shape_cast %51 : vector<8x32xf32> to vector<1x8x32xf32>
    tpu.vector_store %arg12[%53, %c0_24, %c0_25], %56 {strides = array<i32>} : memref<8x8x32xf32, #tpu.memory_space<vmem>>, vector<1x8x32xf32>,
    %57 = arith.select %21, %43, %15 : vector<8x64xi1>, vector<8x64xf32>
    %58 = arith.select %21, %41, %16 : vector<8x64xi1>, vector<8x64xf32>
    %c1_i32 = arith.constant 1 : i32
    %59 = arith.index_cast %c1_i32 : i32 to index
    %c0_26 = arith.constant 0 : index
    %c0_27 = arith.constant 0 : index
    %60 = vector.load %arg1[%59, %c0_26, %c0_27] : memref<8x8x64xf32, #tpu.memory_space<vmem>>, vector<1x8x64xf32>
    %61 = vector.shape_cast %60 : vector<1x8x64xf32> to vector<8x64xf32>
    %cst_28 = arith.constant 0.000000e+00 : f32
    %62 = vector.broadcast %cst_28 : f32 to vector<8x64xf32>
    %63 = arith.cmpf one, %61, %62 : vector<8x64xf32>
    %64 = arith.index_cast %c1_i32 : i32 to index
    %c0_29 = arith.constant 0 : index
    %c0_30 = arith.constant 0 : index
    %65 = vector.load %arg10[%64, %c0_29, %c0_30] : memref<8x8x256xf32, #tpu.memory_space<vmem>>, vector<1x8x256xf32>
    %66 = vector.shape_cast %65 : vector<1x8x256xf32> to vector<8x256xf32>
    %67 = arith.truncf %57 : vector<8x64xf32> to vector<8x64xbf16>
    %cst_31 = arith.constant dense<0.000000e+00> : vector<8x256xf32>
    %68 = tpu.matmul %67, %14, %cst_31 {dimension_numbers = #tpu.dot_dimension_numbers<[1], [0], [0], [1], [0, 0, 1, 1], [], []>} : vector<8x64xbf16>, vector<64x256xbf16>, vector<8x256xf32> -> vector<8x256xf32>
    %69 = arith.addf %66, %68 : vector<8x256xf32>
    %70 = math.tanh %69 : vector<8x256xf32>
    %71 = arith.negf %69 : vector<8x256xf32>
    %72 = math.exp %71 : vector<8x256xf32>
    %cst_32 = arith.constant 1.000000e+00 : f32
    %73 = vector.broadcast %cst_32 : f32 to vector<8x256xf32>
    %74 = arith.addf %73, %72 : vector<8x256xf32>
    %75 = arith.divf %73, %74 : vector<8x256xf32>
    %76 = arith.select %13, %70, %75 : vector<8x256xi1>, vector<8x256xf32>
    %77 = vector.extract_strided_slice %76 {offsets = [0, 0], sizes = [8, 64], strides = [1, 1]} : vector<8x256xf32> to vector<8x64xf32>
    %78 = vector.extract_strided_slice %76 {offsets = [0, 64], sizes = [8, 64], strides = [1, 1]} : vector<8x256xf32> to vector<8x64xf32>
    %79 = vector.extract_strided_slice %76 {offsets = [0, 128], sizes = [8, 64], strides = [1, 1]} : vector<8x256xf32> to vector<8x64xf32>
    %80 = vector.extract_strided_slice %76 {offsets = [0, 192], sizes = [8, 64], strides = [1, 1]} : vector<8x256xf32> to vector<8x64xf32>
    %81 = arith.mulf %78, %58 : vector<8x64xf32>
    %82 = arith.mulf %77, %79 : vector<8x64xf32>
    %83 = arith.addf %81, %82 : vector<8x64xf32>
    %84 = math.tanh %83 : vector<8x64xf32>
    %85 = arith.mulf %80, %84 : vector<8x64xf32>
    %cst_33 = arith.constant 0.000000e+00 : f32
    %86 = vector.broadcast %cst_33 : f32 to vector<8x64xf32>
    %87 = arith.select %63, %85, %86 : vector<8x64xi1>, vector<8x64xf32>
    %88 = vector.extract_strided_slice %87 {offsets = [0, 0], sizes = [8, 32], strides = [1, 1]} : vector<8x64xf32> to vector<8x32xf32>
    %89 = arith.index_cast %c1_i32 : i32 to index
    %c0_34 = arith.constant 0 : index
    %c0_35 = arith.constant 0 : index
    %90 = vector.load %arg11[%89, %c0_34, %c0_35] : memref<8x8x32xf32, #tpu.memory_space<vmem>>, vector<1x8x32xf32>
    %91 = vector.shape_cast %90 : vector<1x8x32xf32> to vector<8x32xf32>
    %92 = vector.shape_cast %88 : vector<8x32xf32> to vector<1x8x32xf32>
    tpu.vector_store %arg11[%89, %c0_34, %c0_35], %92 {strides = array<i32>} : memref<8x8x32xf32, #tpu.memory_space<vmem>>, vector<1x8x32xf32>,
    %93 = vector.extract_strided_slice %87 {offsets = [0, 32], sizes = [8, 32], strides = [1, 1]} : vector<8x64xf32> to vector<8x32xf32>
    %c7_i32_36 = arith.constant 7 : i32
    %94 = arith.subi %c7_i32_36, %c1_i32 : i32
    %95 = arith.index_cast %94 : i32 to index
    %c0_37 = arith.constant 0 : index
    %c0_38 = arith.constant 0 : index
    %96 = vector.load %arg12[%95, %c0_37, %c0_38] : memref<8x8x32xf32, #tpu.memory_space<vmem>>, vector<1x8x32xf32>
    %97 = vector.shape_cast %96 : vector<1x8x32xf32> to vector<8x32xf32>
    %98 = vector.shape_cast %93 : vector<8x32xf32> to vector<1x8x32xf32>
    tpu.vector_store %arg12[%95, %c0_37, %c0_38], %98 {strides = array<i32>} : memref<8x8x32xf32, #tpu.memory_space<vmem>>, vector<1x8x32xf32>,
    %99 = arith.select %63, %85, %57 : vector<8x64xi1>, vector<8x64xf32>
    %100 = arith.select %63, %83, %58 : vector<8x64xi1>, vector<8x64xf32>
    %c2_i32 = arith.constant 2 : i32
    %101 = arith.index_cast %c2_i32 : i32 to index
    %c0_39 = arith.constant 0 : index
    %c0_40 = arith.constant 0 : index
    %102 = vector.load %arg1[%101, %c0_39, %c0_40] : memref<8x8x64xf32, #tpu.memory_space<vmem>>, vector<1x8x64xf32>
    %103 = vector.shape_cast %102 : vector<1x8x64xf32> to vector<8x64xf32>
    %cst_41 = arith.constant 0.000000e+00 : f32
    %104 = vector.broadcast %cst_41 : f32 to vector<8x64xf32>
    %105 = arith.cmpf one, %103, %104 : vector<8x64xf32>
    %106 = arith.index_cast %c2_i32 : i32 to index
    %c0_42 = arith.constant 0 : index
    %c0_43 = arith.constant 0 : index
    %107 = vector.load %arg10[%106, %c0_42, %c0_43] : memref<8x8x256xf32, #tpu.memory_space<vmem>>, vector<1x8x256xf32>
    %108 = vector.shape_cast %107 : vector<1x8x256xf32> to vector<8x256xf32>
    %109 = arith.truncf %99 : vector<8x64xf32> to vector<8x64xbf16>
    %cst_44 = arith.constant dense<0.000000e+00> : vector<8x256xf32>
    %110 = tpu.matmul %109, %14, %cst_44 {dimension_numbers = #tpu.dot_dimension_numbers<[1], [0], [0], [1], [0, 0, 1, 1], [], []>} : vector<8x64xbf16>, vector<64x256xbf16>, vector<8x256xf32> -> vector<8x256xf32>
    %111 = arith.addf %108, %110 : vector<8x256xf32>
    %112 = math.tanh %111 : vector<8x256xf32>
    %113 = arith.negf %111 : vector<8x256xf32>
    %114 = math.exp %113 : vector<8x256xf32>
    %cst_45 = arith.constant 1.000000e+00 : f32
    %115 = vector.broadcast %cst_45 : f32 to vector<8x256xf32>
    %116 = arith.addf %115, %114 : vector<8x256xf32>
    %117 = arith.divf %115, %116 : vector<8x256xf32>
    %118 = arith.select %13, %112, %117 : vector<8x256xi1>, vector<8x256xf32>
    %119 = vector.extract_strided_slice %118 {offsets = [0, 0], sizes = [8, 64], strides = [1, 1]} : vector<8x256xf32> to vector<8x64xf32>
    %120 = vector.extract_strided_slice %118 {offsets = [0, 64], sizes = [8, 64], strides = [1, 1]} : vector<8x256xf32> to vector<8x64xf32>
    %121 = vector.extract_strided_slice %118 {offsets = [0, 128], sizes = [8, 64], strides = [1, 1]} : vector<8x256xf32> to vector<8x64xf32>
    %122 = vector.extract_strided_slice %118 {offsets = [0, 192], sizes = [8, 64], strides = [1, 1]} : vector<8x256xf32> to vector<8x64xf32>
    %123 = arith.mulf %120, %100 : vector<8x64xf32>
    %124 = arith.mulf %119, %121 : vector<8x64xf32>
    %125 = arith.addf %123, %124 : vector<8x64xf32>
    %126 = math.tanh %125 : vector<8x64xf32>
    %127 = arith.mulf %122, %126 : vector<8x64xf32>
    %cst_46 = arith.constant 0.000000e+00 : f32
    %128 = vector.broadcast %cst_46 : f32 to vector<8x64xf32>
    %129 = arith.select %105, %127, %128 : vector<8x64xi1>, vector<8x64xf32>
    %130 = vector.extract_strided_slice %129 {offsets = [0, 0], sizes = [8, 32], strides = [1, 1]} : vector<8x64xf32> to vector<8x32xf32>
    %131 = arith.index_cast %c2_i32 : i32 to index
    %c0_47 = arith.constant 0 : index
    %c0_48 = arith.constant 0 : index
    %132 = vector.load %arg11[%131, %c0_47, %c0_48] : memref<8x8x32xf32, #tpu.memory_space<vmem>>, vector<1x8x32xf32>
    %133 = vector.shape_cast %132 : vector<1x8x32xf32> to vector<8x32xf32>
    %134 = vector.shape_cast %130 : vector<8x32xf32> to vector<1x8x32xf32>
    tpu.vector_store %arg11[%131, %c0_47, %c0_48], %134 {strides = array<i32>} : memref<8x8x32xf32, #tpu.memory_space<vmem>>, vector<1x8x32xf32>,
    %135 = vector.extract_strided_slice %129 {offsets = [0, 32], sizes = [8, 32], strides = [1, 1]} : vector<8x64xf32> to vector<8x32xf32>
    %c7_i32_49 = arith.constant 7 : i32
    %136 = arith.subi %c7_i32_49, %c2_i32 : i32
    %137 = arith.index_cast %136 : i32 to index
    %c0_50 = arith.constant 0 : index
    %c0_51 = arith.constant 0 : index
    %138 = vector.load %arg12[%137, %c0_50, %c0_51] : memref<8x8x32xf32, #tpu.memory_space<vmem>>, vector<1x8x32xf32>
    %139 = vector.shape_cast %138 : vector<1x8x32xf32> to vector<8x32xf32>
    %140 = vector.shape_cast %135 : vector<8x32xf32> to vector<1x8x32xf32>
    tpu.vector_store %arg12[%137, %c0_50, %c0_51], %140 {strides = array<i32>} : memref<8x8x32xf32, #tpu.memory_space<vmem>>, vector<1x8x32xf32>,
    %141 = arith.select %105, %127, %99 : vector<8x64xi1>, vector<8x64xf32>
    %142 = arith.select %105, %125, %100 : vector<8x64xi1>, vector<8x64xf32>
    %c3_i32 = arith.constant 3 : i32
    %143 = arith.index_cast %c3_i32 : i32 to index
    %c0_52 = arith.constant 0 : index
    %c0_53 = arith.constant 0 : index
    %144 = vector.load %arg1[%143, %c0_52, %c0_53] : memref<8x8x64xf32, #tpu.memory_space<vmem>>, vector<1x8x64xf32>
    %145 = vector.shape_cast %144 : vector<1x8x64xf32> to vector<8x64xf32>
    %cst_54 = arith.constant 0.000000e+00 : f32
    %146 = vector.broadcast %cst_54 : f32 to vector<8x64xf32>
    %147 = arith.cmpf one, %145, %146 : vector<8x64xf32>
    %148 = arith.index_cast %c3_i32 : i32 to index
    %c0_55 = arith.constant 0 : index
    %c0_56 = arith.constant 0 : index
    %149 = vector.load %arg10[%148, %c0_55, %c0_56] : memref<8x8x256xf32, #tpu.memory_space<vmem>>, vector<1x8x256xf32>
    %150 = vector.shape_cast %149 : vector<1x8x256xf32> to vector<8x256xf32>
    %151 = arith.truncf %141 : vector<8x64xf32> to vector<8x64xbf16>
    %cst_57 = arith.constant dense<0.000000e+00> : vector<8x256xf32>
    %152 = tpu.matmul %151, %14, %cst_57 {dimension_numbers = #tpu.dot_dimension_numbers<[1], [0], [0], [1], [0, 0, 1, 1], [], []>} : vector<8x64xbf16>, vector<64x256xbf16>, vector<8x256xf32> -> vector<8x256xf32>
    %153 = arith.addf %150, %152 : vector<8x256xf32>
    %154 = math.tanh %153 : vector<8x256xf32>
    %155 = arith.negf %153 : vector<8x256xf32>
    %156 = math.exp %155 : vector<8x256xf32>
    %cst_58 = arith.constant 1.000000e+00 : f32
    %157 = vector.broadcast %cst_58 : f32 to vector<8x256xf32>
    %158 = arith.addf %157, %156 : vector<8x256xf32>
    %159 = arith.divf %157, %158 : vector<8x256xf32>
    %160 = arith.select %13, %154, %159 : vector<8x256xi1>, vector<8x256xf32>
    %161 = vector.extract_strided_slice %160 {offsets = [0, 0], sizes = [8, 64], strides = [1, 1]} : vector<8x256xf32> to vector<8x64xf32>
    %162 = vector.extract_strided_slice %160 {offsets = [0, 64], sizes = [8, 64], strides = [1, 1]} : vector<8x256xf32> to vector<8x64xf32>
    %163 = vector.extract_strided_slice %160 {offsets = [0, 128], sizes = [8, 64], strides = [1, 1]} : vector<8x256xf32> to vector<8x64xf32>
    %164 = vector.extract_strided_slice %160 {offsets = [0, 192], sizes = [8, 64], strides = [1, 1]} : vector<8x256xf32> to vector<8x64xf32>
    %165 = arith.mulf %162, %142 : vector<8x64xf32>
    %166 = arith.mulf %161, %163 : vector<8x64xf32>
    %167 = arith.addf %165, %166 : vector<8x64xf32>
    %168 = math.tanh %167 : vector<8x64xf32>
    %169 = arith.mulf %164, %168 : vector<8x64xf32>
    %cst_59 = arith.constant 0.000000e+00 : f32
    %170 = vector.broadcast %cst_59 : f32 to vector<8x64xf32>
    %171 = arith.select %147, %169, %170 : vector<8x64xi1>, vector<8x64xf32>
    %172 = vector.extract_strided_slice %171 {offsets = [0, 0], sizes = [8, 32], strides = [1, 1]} : vector<8x64xf32> to vector<8x32xf32>
    %173 = arith.index_cast %c3_i32 : i32 to index
    %c0_60 = arith.constant 0 : index
    %c0_61 = arith.constant 0 : index
    %174 = vector.load %arg11[%173, %c0_60, %c0_61] : memref<8x8x32xf32, #tpu.memory_space<vmem>>, vector<1x8x32xf32>
    %175 = vector.shape_cast %174 : vector<1x8x32xf32> to vector<8x32xf32>
    %176 = vector.shape_cast %172 : vector<8x32xf32> to vector<1x8x32xf32>
    tpu.vector_store %arg11[%173, %c0_60, %c0_61], %176 {strides = array<i32>} : memref<8x8x32xf32, #tpu.memory_space<vmem>>, vector<1x8x32xf32>,
    %177 = vector.extract_strided_slice %171 {offsets = [0, 32], sizes = [8, 32], strides = [1, 1]} : vector<8x64xf32> to vector<8x32xf32>
    %c7_i32_62 = arith.constant 7 : i32
    %178 = arith.subi %c7_i32_62, %c3_i32 : i32
    %179 = arith.index_cast %178 : i32 to index
    %c0_63 = arith.constant 0 : index
    %c0_64 = arith.constant 0 : index
    %180 = vector.load %arg12[%179, %c0_63, %c0_64] : memref<8x8x32xf32, #tpu.memory_space<vmem>>, vector<1x8x32xf32>
    %181 = vector.shape_cast %180 : vector<1x8x32xf32> to vector<8x32xf32>
    %182 = vector.shape_cast %177 : vector<8x32xf32> to vector<1x8x32xf32>
    tpu.vector_store %arg12[%179, %c0_63, %c0_64], %182 {strides = array<i32>} : memref<8x8x32xf32, #tpu.memory_space<vmem>>, vector<1x8x32xf32>,
    %183 = arith.select %147, %169, %141 : vector<8x64xi1>, vector<8x64xf32>
    %184 = arith.select %147, %167, %142 : vector<8x64xi1>, vector<8x64xf32>
    %c4_i32 = arith.constant 4 : i32
    %185 = arith.index_cast %c4_i32 : i32 to index
    %c0_65 = arith.constant 0 : index
    %c0_66 = arith.constant 0 : index
    %186 = vector.load %arg1[%185, %c0_65, %c0_66] : memref<8x8x64xf32, #tpu.memory_space<vmem>>, vector<1x8x64xf32>
    %187 = vector.shape_cast %186 : vector<1x8x64xf32> to vector<8x64xf32>
    %cst_67 = arith.constant 0.000000e+00 : f32
    %188 = vector.broadcast %cst_67 : f32 to vector<8x64xf32>
    %189 = arith.cmpf one, %187, %188 : vector<8x64xf32>
    %190 = arith.index_cast %c4_i32 : i32 to index
    %c0_68 = arith.constant 0 : index
    %c0_69 = arith.constant 0 : index
    %191 = vector.load %arg10[%190, %c0_68, %c0_69] : memref<8x8x256xf32, #tpu.memory_space<vmem>>, vector<1x8x256xf32>
    %192 = vector.shape_cast %191 : vector<1x8x256xf32> to vector<8x256xf32>
    %193 = arith.truncf %183 : vector<8x64xf32> to vector<8x64xbf16>
    %cst_70 = arith.constant dense<0.000000e+00> : vector<8x256xf32>
    %194 = tpu.matmul %193, %14, %cst_70 {dimension_numbers = #tpu.dot_dimension_numbers<[1], [0], [0], [1], [0, 0, 1, 1], [], []>} : vector<8x64xbf16>, vector<64x256xbf16>, vector<8x256xf32> -> vector<8x256xf32>
    %195 = arith.addf %192, %194 : vector<8x256xf32>
    %196 = math.tanh %195 : vector<8x256xf32>
    %197 = arith.negf %195 : vector<8x256xf32>
    %198 = math.exp %197 : vector<8x256xf32>
    %cst_71 = arith.constant 1.000000e+00 : f32
    %199 = vector.broadcast %cst_71 : f32 to vector<8x256xf32>
    %200 = arith.addf %199, %198 : vector<8x256xf32>
    %201 = arith.divf %199, %200 : vector<8x256xf32>
    %202 = arith.select %13, %196, %201 : vector<8x256xi1>, vector<8x256xf32>
    %203 = vector.extract_strided_slice %202 {offsets = [0, 0], sizes = [8, 64], strides = [1, 1]} : vector<8x256xf32> to vector<8x64xf32>
    %204 = vector.extract_strided_slice %202 {offsets = [0, 64], sizes = [8, 64], strides = [1, 1]} : vector<8x256xf32> to vector<8x64xf32>
    %205 = vector.extract_strided_slice %202 {offsets = [0, 128], sizes = [8, 64], strides = [1, 1]} : vector<8x256xf32> to vector<8x64xf32>
    %206 = vector.extract_strided_slice %202 {offsets = [0, 192], sizes = [8, 64], strides = [1, 1]} : vector<8x256xf32> to vector<8x64xf32>
    %207 = arith.mulf %204, %184 : vector<8x64xf32>
    %208 = arith.mulf %203, %205 : vector<8x64xf32>
    %209 = arith.addf %207, %208 : vector<8x64xf32>
    %210 = math.tanh %209 : vector<8x64xf32>
    %211 = arith.mulf %206, %210 : vector<8x64xf32>
    %cst_72 = arith.constant 0.000000e+00 : f32
    %212 = vector.broadcast %cst_72 : f32 to vector<8x64xf32>
    %213 = arith.select %189, %211, %212 : vector<8x64xi1>, vector<8x64xf32>
    %214 = vector.extract_strided_slice %213 {offsets = [0, 0], sizes = [8, 32], strides = [1, 1]} : vector<8x64xf32> to vector<8x32xf32>
    %215 = arith.index_cast %c4_i32 : i32 to index
    %c0_73 = arith.constant 0 : index
    %c0_74 = arith.constant 0 : index
    %216 = vector.load %arg11[%215, %c0_73, %c0_74] : memref<8x8x32xf32, #tpu.memory_space<vmem>>, vector<1x8x32xf32>
    %217 = vector.shape_cast %216 : vector<1x8x32xf32> to vector<8x32xf32>
    %218 = vector.shape_cast %214 : vector<8x32xf32> to vector<1x8x32xf32>
    tpu.vector_store %arg11[%215, %c0_73, %c0_74], %218 {strides = array<i32>} : memref<8x8x32xf32, #tpu.memory_space<vmem>>, vector<1x8x32xf32>,
    %219 = vector.extract_strided_slice %213 {offsets = [0, 32], sizes = [8, 32], strides = [1, 1]} : vector<8x64xf32> to vector<8x32xf32>
    %c7_i32_75 = arith.constant 7 : i32
    %220 = arith.subi %c7_i32_75, %c4_i32 : i32
    %221 = arith.index_cast %220 : i32 to index
    %c0_76 = arith.constant 0 : index
    %c0_77 = arith.constant 0 : index
    %222 = vector.load %arg12[%221, %c0_76, %c0_77] : memref<8x8x32xf32, #tpu.memory_space<vmem>>, vector<1x8x32xf32>
    %223 = vector.shape_cast %222 : vector<1x8x32xf32> to vector<8x32xf32>
    %224 = vector.shape_cast %219 : vector<8x32xf32> to vector<1x8x32xf32>
    tpu.vector_store %arg12[%221, %c0_76, %c0_77], %224 {strides = array<i32>} : memref<8x8x32xf32, #tpu.memory_space<vmem>>, vector<1x8x32xf32>,
    %225 = arith.select %189, %211, %183 : vector<8x64xi1>, vector<8x64xf32>
    %226 = arith.select %189, %209, %184 : vector<8x64xi1>, vector<8x64xf32>
    %c5_i32 = arith.constant 5 : i32
    %227 = arith.index_cast %c5_i32 : i32 to index
    %c0_78 = arith.constant 0 : index
    %c0_79 = arith.constant 0 : index
    %228 = vector.load %arg1[%227, %c0_78, %c0_79] : memref<8x8x64xf32, #tpu.memory_space<vmem>>, vector<1x8x64xf32>
    %229 = vector.shape_cast %228 : vector<1x8x64xf32> to vector<8x64xf32>
    %cst_80 = arith.constant 0.000000e+00 : f32
    %230 = vector.broadcast %cst_80 : f32 to vector<8x64xf32>
    %231 = arith.cmpf one, %229, %230 : vector<8x64xf32>
    %232 = arith.index_cast %c5_i32 : i32 to index
    %c0_81 = arith.constant 0 : index
    %c0_82 = arith.constant 0 : index
    %233 = vector.load %arg10[%232, %c0_81, %c0_82] : memref<8x8x256xf32, #tpu.memory_space<vmem>>, vector<1x8x256xf32>
    %234 = vector.shape_cast %233 : vector<1x8x256xf32> to vector<8x256xf32>
    %235 = arith.truncf %225 : vector<8x64xf32> to vector<8x64xbf16>
    %cst_83 = arith.constant dense<0.000000e+00> : vector<8x256xf32>
    %236 = tpu.matmul %235, %14, %cst_83 {dimension_numbers = #tpu.dot_dimension_numbers<[1], [0], [0], [1], [0, 0, 1, 1], [], []>} : vector<8x64xbf16>, vector<64x256xbf16>, vector<8x256xf32> -> vector<8x256xf32>
    %237 = arith.addf %234, %236 : vector<8x256xf32>
    %238 = math.tanh %237 : vector<8x256xf32>
    %239 = arith.negf %237 : vector<8x256xf32>
    %240 = math.exp %239 : vector<8x256xf32>
    %cst_84 = arith.constant 1.000000e+00 : f32
    %241 = vector.broadcast %cst_84 : f32 to vector<8x256xf32>
    %242 = arith.addf %241, %240 : vector<8x256xf32>
    %243 = arith.divf %241, %242 : vector<8x256xf32>
    %244 = arith.select %13, %238, %243 : vector<8x256xi1>, vector<8x256xf32>
    %245 = vector.extract_strided_slice %244 {offsets = [0, 0], sizes = [8, 64], strides = [1, 1]} : vector<8x256xf32> to vector<8x64xf32>
    %246 = vector.extract_strided_slice %244 {offsets = [0, 64], sizes = [8, 64], strides = [1, 1]} : vector<8x256xf32> to vector<8x64xf32>
    %247 = vector.extract_strided_slice %244 {offsets = [0, 128], sizes = [8, 64], strides = [1, 1]} : vector<8x256xf32> to vector<8x64xf32>
    %248 = vector.extract_strided_slice %244 {offsets = [0, 192], sizes = [8, 64], strides = [1, 1]} : vector<8x256xf32> to vector<8x64xf32>
    %249 = arith.mulf %246, %226 : vector<8x64xf32>
    %250 = arith.mulf %245, %247 : vector<8x64xf32>
    %251 = arith.addf %249, %250 : vector<8x64xf32>
    %252 = math.tanh %251 : vector<8x64xf32>
    %253 = arith.mulf %248, %252 : vector<8x64xf32>
    %cst_85 = arith.constant 0.000000e+00 : f32
    %254 = vector.broadcast %cst_85 : f32 to vector<8x64xf32>
    %255 = arith.select %231, %253, %254 : vector<8x64xi1>, vector<8x64xf32>
    %256 = vector.extract_strided_slice %255 {offsets = [0, 0], sizes = [8, 32], strides = [1, 1]} : vector<8x64xf32> to vector<8x32xf32>
    %257 = arith.index_cast %c5_i32 : i32 to index
    %c0_86 = arith.constant 0 : index
    %c0_87 = arith.constant 0 : index
    %258 = vector.load %arg11[%257, %c0_86, %c0_87] : memref<8x8x32xf32, #tpu.memory_space<vmem>>, vector<1x8x32xf32>
    %259 = vector.shape_cast %258 : vector<1x8x32xf32> to vector<8x32xf32>
    %260 = vector.shape_cast %256 : vector<8x32xf32> to vector<1x8x32xf32>
    tpu.vector_store %arg11[%257, %c0_86, %c0_87], %260 {strides = array<i32>} : memref<8x8x32xf32, #tpu.memory_space<vmem>>, vector<1x8x32xf32>,
    %261 = vector.extract_strided_slice %255 {offsets = [0, 32], sizes = [8, 32], strides = [1, 1]} : vector<8x64xf32> to vector<8x32xf32>
    %c7_i32_88 = arith.constant 7 : i32
    %262 = arith.subi %c7_i32_88, %c5_i32 : i32
    %263 = arith.index_cast %262 : i32 to index
    %c0_89 = arith.constant 0 : index
    %c0_90 = arith.constant 0 : index
    %264 = vector.load %arg12[%263, %c0_89, %c0_90] : memref<8x8x32xf32, #tpu.memory_space<vmem>>, vector<1x8x32xf32>
    %265 = vector.shape_cast %264 : vector<1x8x32xf32> to vector<8x32xf32>
    %266 = vector.shape_cast %261 : vector<8x32xf32> to vector<1x8x32xf32>
    tpu.vector_store %arg12[%263, %c0_89, %c0_90], %266 {strides = array<i32>} : memref<8x8x32xf32, #tpu.memory_space<vmem>>, vector<1x8x32xf32>,
    %267 = arith.select %231, %253, %225 : vector<8x64xi1>, vector<8x64xf32>
    %268 = arith.select %231, %251, %226 : vector<8x64xi1>, vector<8x64xf32>
    %c6_i32 = arith.constant 6 : i32
    %269 = arith.index_cast %c6_i32 : i32 to index
    %c0_91 = arith.constant 0 : index
    %c0_92 = arith.constant 0 : index
    %270 = vector.load %arg1[%269, %c0_91, %c0_92] : memref<8x8x64xf32, #tpu.memory_space<vmem>>, vector<1x8x64xf32>
    %271 = vector.shape_cast %270 : vector<1x8x64xf32> to vector<8x64xf32>
    %cst_93 = arith.constant 0.000000e+00 : f32
    %272 = vector.broadcast %cst_93 : f32 to vector<8x64xf32>
    %273 = arith.cmpf one, %271, %272 : vector<8x64xf32>
    %274 = arith.index_cast %c6_i32 : i32 to index
    %c0_94 = arith.constant 0 : index
    %c0_95 = arith.constant 0 : index
    %275 = vector.load %arg10[%274, %c0_94, %c0_95] : memref<8x8x256xf32, #tpu.memory_space<vmem>>, vector<1x8x256xf32>
    %276 = vector.shape_cast %275 : vector<1x8x256xf32> to vector<8x256xf32>
    %277 = arith.truncf %267 : vector<8x64xf32> to vector<8x64xbf16>
    %cst_96 = arith.constant dense<0.000000e+00> : vector<8x256xf32>
    %278 = tpu.matmul %277, %14, %cst_96 {dimension_numbers = #tpu.dot_dimension_numbers<[1], [0], [0], [1], [0, 0, 1, 1], [], []>} : vector<8x64xbf16>, vector<64x256xbf16>, vector<8x256xf32> -> vector<8x256xf32>
    %279 = arith.addf %276, %278 : vector<8x256xf32>
    %280 = math.tanh %279 : vector<8x256xf32>
    %281 = arith.negf %279 : vector<8x256xf32>
    %282 = math.exp %281 : vector<8x256xf32>
    %cst_97 = arith.constant 1.000000e+00 : f32
    %283 = vector.broadcast %cst_97 : f32 to vector<8x256xf32>
    %284 = arith.addf %283, %282 : vector<8x256xf32>
    %285 = arith.divf %283, %284 : vector<8x256xf32>
    %286 = arith.select %13, %280, %285 : vector<8x256xi1>, vector<8x256xf32>
    %287 = vector.extract_strided_slice %286 {offsets = [0, 0], sizes = [8, 64], strides = [1, 1]} : vector<8x256xf32> to vector<8x64xf32>
    %288 = vector.extract_strided_slice %286 {offsets = [0, 64], sizes = [8, 64], strides = [1, 1]} : vector<8x256xf32> to vector<8x64xf32>
    %289 = vector.extract_strided_slice %286 {offsets = [0, 128], sizes = [8, 64], strides = [1, 1]} : vector<8x256xf32> to vector<8x64xf32>
    %290 = vector.extract_strided_slice %286 {offsets = [0, 192], sizes = [8, 64], strides = [1, 1]} : vector<8x256xf32> to vector<8x64xf32>
    %291 = arith.mulf %288, %268 : vector<8x64xf32>
    %292 = arith.mulf %287, %289 : vector<8x64xf32>
    %293 = arith.addf %291, %292 : vector<8x64xf32>
    %294 = math.tanh %293 : vector<8x64xf32>
    %295 = arith.mulf %290, %294 : vector<8x64xf32>
    %cst_98 = arith.constant 0.000000e+00 : f32
    %296 = vector.broadcast %cst_98 : f32 to vector<8x64xf32>
    %297 = arith.select %273, %295, %296 : vector<8x64xi1>, vector<8x64xf32>
    %298 = vector.extract_strided_slice %297 {offsets = [0, 0], sizes = [8, 32], strides = [1, 1]} : vector<8x64xf32> to vector<8x32xf32>
    %299 = arith.index_cast %c6_i32 : i32 to index
    %c0_99 = arith.constant 0 : index
    %c0_100 = arith.constant 0 : index
    %300 = vector.load %arg11[%299, %c0_99, %c0_100] : memref<8x8x32xf32, #tpu.memory_space<vmem>>, vector<1x8x32xf32>
    %301 = vector.shape_cast %300 : vector<1x8x32xf32> to vector<8x32xf32>
    %302 = vector.shape_cast %298 : vector<8x32xf32> to vector<1x8x32xf32>
    tpu.vector_store %arg11[%299, %c0_99, %c0_100], %302 {strides = array<i32>} : memref<8x8x32xf32, #tpu.memory_space<vmem>>, vector<1x8x32xf32>,
    %303 = vector.extract_strided_slice %297 {offsets = [0, 32], sizes = [8, 32], strides = [1, 1]} : vector<8x64xf32> to vector<8x32xf32>
    %c7_i32_101 = arith.constant 7 : i32
    %304 = arith.subi %c7_i32_101, %c6_i32 : i32
    %305 = arith.index_cast %304 : i32 to index
    %c0_102 = arith.constant 0 : index
    %c0_103 = arith.constant 0 : index
    %306 = vector.load %arg12[%305, %c0_102, %c0_103] : memref<8x8x32xf32, #tpu.memory_space<vmem>>, vector<1x8x32xf32>
    %307 = vector.shape_cast %306 : vector<1x8x32xf32> to vector<8x32xf32>
    %308 = vector.shape_cast %303 : vector<8x32xf32> to vector<1x8x32xf32>
    tpu.vector_store %arg12[%305, %c0_102, %c0_103], %308 {strides = array<i32>} : memref<8x8x32xf32, #tpu.memory_space<vmem>>, vector<1x8x32xf32>,
    %309 = arith.select %273, %295, %267 : vector<8x64xi1>, vector<8x64xf32>
    %310 = arith.select %273, %293, %268 : vector<8x64xi1>, vector<8x64xf32>
    %c7_i32_104 = arith.constant 7 : i32
    %311 = arith.index_cast %c7_i32_104 : i32 to index
    %c0_105 = arith.constant 0 : index
    %c0_106 = arith.constant 0 : index
    %312 = vector.load %arg1[%311, %c0_105, %c0_106] : memref<8x8x64xf32, #tpu.memory_space<vmem>>, vector<1x8x64xf32>
    %313 = vector.shape_cast %312 : vector<1x8x64xf32> to vector<8x64xf32>
    %cst_107 = arith.constant 0.000000e+00 : f32
    %314 = vector.broadcast %cst_107 : f32 to vector<8x64xf32>
    %315 = arith.cmpf one, %313, %314 : vector<8x64xf32>
    %316 = arith.index_cast %c7_i32_104 : i32 to index
    %c0_108 = arith.constant 0 : index
    %c0_109 = arith.constant 0 : index
    %317 = vector.load %arg10[%316, %c0_108, %c0_109] : memref<8x8x256xf32, #tpu.memory_space<vmem>>, vector<1x8x256xf32>
    %318 = vector.shape_cast %317 : vector<1x8x256xf32> to vector<8x256xf32>
    %319 = arith.truncf %309 : vector<8x64xf32> to vector<8x64xbf16>
    %cst_110 = arith.constant dense<0.000000e+00> : vector<8x256xf32>
    %320 = tpu.matmul %319, %14, %cst_110 {dimension_numbers = #tpu.dot_dimension_numbers<[1], [0], [0], [1], [0, 0, 1, 1], [], []>} : vector<8x64xbf16>, vector<64x256xbf16>, vector<8x256xf32> -> vector<8x256xf32>
    %321 = arith.addf %318, %320 : vector<8x256xf32>
    %322 = math.tanh %321 : vector<8x256xf32>
    %323 = arith.negf %321 : vector<8x256xf32>
    %324 = math.exp %323 : vector<8x256xf32>
    %cst_111 = arith.constant 1.000000e+00 : f32
    %325 = vector.broadcast %cst_111 : f32 to vector<8x256xf32>
    %326 = arith.addf %325, %324 : vector<8x256xf32>
    %327 = arith.divf %325, %326 : vector<8x256xf32>
    %328 = arith.select %13, %322, %327 : vector<8x256xi1>, vector<8x256xf32>
    %329 = vector.extract_strided_slice %328 {offsets = [0, 0], sizes = [8, 64], strides = [1, 1]} : vector<8x256xf32> to vector<8x64xf32>
    %330 = vector.extract_strided_slice %328 {offsets = [0, 64], sizes = [8, 64], strides = [1, 1]} : vector<8x256xf32> to vector<8x64xf32>
    %331 = vector.extract_strided_slice %328 {offsets = [0, 128], sizes = [8, 64], strides = [1, 1]} : vector<8x256xf32> to vector<8x64xf32>
    %332 = vector.extract_strided_slice %328 {offsets = [0, 192], sizes = [8, 64], strides = [1, 1]} : vector<8x256xf32> to vector<8x64xf32>
    %333 = arith.mulf %330, %310 : vector<8x64xf32>
    %334 = arith.mulf %329, %331 : vector<8x64xf32>
    %335 = arith.addf %333, %334 : vector<8x64xf32>
    %336 = math.tanh %335 : vector<8x64xf32>
    %337 = arith.mulf %332, %336 : vector<8x64xf32>
    %cst_112 = arith.constant 0.000000e+00 : f32
    %338 = vector.broadcast %cst_112 : f32 to vector<8x64xf32>
    %339 = arith.select %315, %337, %338 : vector<8x64xi1>, vector<8x64xf32>
    %340 = vector.extract_strided_slice %339 {offsets = [0, 0], sizes = [8, 32], strides = [1, 1]} : vector<8x64xf32> to vector<8x32xf32>
    %341 = arith.index_cast %c7_i32_104 : i32 to index
    %c0_113 = arith.constant 0 : index
    %c0_114 = arith.constant 0 : index
    %342 = vector.load %arg11[%341, %c0_113, %c0_114] : memref<8x8x32xf32, #tpu.memory_space<vmem>>, vector<1x8x32xf32>
    %343 = vector.shape_cast %342 : vector<1x8x32xf32> to vector<8x32xf32>
    %344 = vector.shape_cast %340 : vector<8x32xf32> to vector<1x8x32xf32>
    tpu.vector_store %arg11[%341, %c0_113, %c0_114], %344 {strides = array<i32>} : memref<8x8x32xf32, #tpu.memory_space<vmem>>, vector<1x8x32xf32>,
    %345 = vector.extract_strided_slice %339 {offsets = [0, 32], sizes = [8, 32], strides = [1, 1]} : vector<8x64xf32> to vector<8x32xf32>
    %c7_i32_115 = arith.constant 7 : i32
    %346 = arith.subi %c7_i32_115, %c7_i32_104 : i32
    %347 = arith.index_cast %346 : i32 to index
    %c0_116 = arith.constant 0 : index
    %c0_117 = arith.constant 0 : index
    %348 = vector.load %arg12[%347, %c0_116, %c0_117] : memref<8x8x32xf32, #tpu.memory_space<vmem>>, vector<1x8x32xf32>
    %349 = vector.shape_cast %348 : vector<1x8x32xf32> to vector<8x32xf32>
    %350 = vector.shape_cast %345 : vector<8x32xf32> to vector<1x8x32xf32>
    tpu.vector_store %arg12[%347, %c0_116, %c0_117], %350 {strides = array<i32>} : memref<8x8x32xf32, #tpu.memory_space<vmem>>, vector<1x8x32xf32>,
    %351 = arith.select %315, %337, %309 : vector<8x64xi1>, vector<8x64xf32>
    %352 = arith.select %315, %335, %310 : vector<8x64xi1>, vector<8x64xf32>
    %c8_i32 = arith.constant 8 : i32
    %353 = vector.extract_strided_slice %351 {offsets = [0, 0], sizes = [8, 32], strides = [1, 1]} : vector<8x64xf32> to vector<8x32xf32>
    %c0_118 = arith.constant 0 : index
    %c0_119 = arith.constant 0 : index
    %c0_120 = arith.constant 0 : index
    %354 = vector.load %arg8[%c0_118, %c0_119, %c0_120] : memref<2x8x32xf32, #tpu.memory_space<vmem>>, vector<1x8x32xf32>
    %355 = vector.shape_cast %354 : vector<1x8x32xf32> to vector<8x32xf32>
    %356 = vector.shape_cast %353 : vector<8x32xf32> to vector<1x8x32xf32>
    tpu.vector_store %arg8[%c0_118, %c0_119, %c0_120], %356 {strides = array<i32>} : memref<2x8x32xf32, #tpu.memory_space<vmem>>, vector<1x8x32xf32>,
    %357 = vector.extract_strided_slice %351 {offsets = [0, 32], sizes = [8, 32], strides = [1, 1]} : vector<8x64xf32> to vector<8x32xf32>
    %c1 = arith.constant 1 : index
    %c0_121 = arith.constant 0 : index
    %c0_122 = arith.constant 0 : index
    %358 = vector.load %arg8[%c1, %c0_121, %c0_122] : memref<2x8x32xf32, #tpu.memory_space<vmem>>, vector<1x8x32xf32>
    %359 = vector.shape_cast %358 : vector<1x8x32xf32> to vector<8x32xf32>
    %360 = vector.shape_cast %357 : vector<8x32xf32> to vector<1x8x32xf32>
    tpu.vector_store %arg8[%c1, %c0_121, %c0_122], %360 {strides = array<i32>} : memref<2x8x32xf32, #tpu.memory_space<vmem>>, vector<1x8x32xf32>,
    %361 = vector.extract_strided_slice %352 {offsets = [0, 0], sizes = [8, 32], strides = [1, 1]} : vector<8x64xf32> to vector<8x32xf32>
    %c0_123 = arith.constant 0 : index
    %c0_124 = arith.constant 0 : index
    %c0_125 = arith.constant 0 : index
    %362 = vector.load %arg9[%c0_123, %c0_124, %c0_125] : memref<2x8x32xf32, #tpu.memory_space<vmem>>, vector<1x8x32xf32>
    %363 = vector.shape_cast %362 : vector<1x8x32xf32> to vector<8x32xf32>
    %364 = vector.shape_cast %361 : vector<8x32xf32> to vector<1x8x32xf32>
    tpu.vector_store %arg9[%c0_123, %c0_124, %c0_125], %364 {strides = array<i32>} : memref<2x8x32xf32, #tpu.memory_space<vmem>>, vector<1x8x32xf32>,
    %365 = vector.extract_strided_slice %352 {offsets = [0, 32], sizes = [8, 32], strides = [1, 1]} : vector<8x64xf32> to vector<8x32xf32>
    %c1_126 = arith.constant 1 : index
    %c0_127 = arith.constant 0 : index
    %c0_128 = arith.constant 0 : index
    %366 = vector.load %arg9[%c1_126, %c0_127, %c0_128] : memref<2x8x32xf32, #tpu.memory_space<vmem>>, vector<1x8x32xf32>
    %367 = vector.shape_cast %366 : vector<1x8x32xf32> to vector<8x32xf32>
    %368 = vector.shape_cast %365 : vector<8x32xf32> to vector<1x8x32xf32>
    tpu.vector_store %arg9[%c1_126, %c0_127, %c0_128], %368 {strides = array<i32>} : memref<2x8x32xf32, #tpu.memory_space<vmem>>, vector<1x8x32xf32>,
    %c0_129 = arith.constant 0 : index
    %c0_130 = arith.constant 0 : index
    %c0_131 = arith.constant 0 : index
    %369 = vector.load %arg11[%c0_129, %c0_130, %c0_131] : memref<8x8x32xf32, #tpu.memory_space<vmem>>, vector<8x8x32xf32>
    %c0_132 = arith.constant 0 : index
    %c0_133 = arith.constant 0 : index
    %c0_134 = arith.constant 0 : index
    %370 = vector.load %arg12[%c0_132, %c0_133, %c0_134] : memref<8x8x32xf32, #tpu.memory_space<vmem>>, vector<8x8x32xf32>
    %371 = arith.addf %369, %370 : vector<8x8x32xf32>
    %c0_135 = arith.constant 0 : index
    %c0_136 = arith.constant 0 : index
    %c0_137 = arith.constant 0 : index
    %372 = vector.load %arg7[%c0_135, %c0_136, %c0_137] : memref<8x8x32xf32, #tpu.memory_space<vmem>>, vector<8x8x32xf32>
    tpu.vector_store %arg7[%c0_135, %c0_136, %c0_137], %371 {strides = array<i32>} : memref<8x8x32xf32, #tpu.memory_space<vmem>>, vector<8x8x32xf32>,
    return
  }
}

</mosaic_0001>

<llo_original>
// kernel: squeeze.4
$region0: #{squeeze.4}
  %s0 = inlined_call_operand.vmem [shape: bf16[1,16,128], index: 0, kind: input, shape index: {}]
  %s1 = inlined_call_operand.vmem [shape: bf16[16,4,1,32], index: 1, kind: output, shape index: {}]
  $region1: #{squeeze.4} parent=0
    #allocation0 [shape = 'u8[262144]{0}', space=vmem, size = 0x40000, scoped, tag = 'scoped mem for output reshape']
    #allocation1 [shape = 'u8[8192]{0}', space=vmem, size = 0x2000, scoped, tag = 'scoped mem for input reshape']
    %s3 = smul.u32 4, 2
    %s4 = sshllo.u32 0, %s3
    %s5 = scalar_lea.vmem %s0, 4
    %s6 = sshrl.u32 %s4, 1
    %s7 = sor.u32 %s4, %s6
    %s8 = sand.u32 %s7, 85
    %s9 = sshrl.u32 %s8, 1
    %s10 = sor.u32 %s8, %s9
    %s11 = sand.u32 51, %s10
    %s12 = sshrl.u32 %s11, 2
    %s13 = sor.u32 %s11, %s12
    %s14 = sand.u32 15, %s13
    %v15 = vld [vmem:[%s5] sm:%s14]
    %v16 = vunpack.c.l.bf16 %v15
    %v17 = vunpack.c.h.bf16 %v15
    %s18 = scalar_lea.vmem [#allocation1], 8
    %19 = vst [vmem:[%s18] sm:%s4] %v16
    %s20 = sshrl.u32 %s4, 1
    %s21 = sor.u32 %s4, %s20
    %s22 = sand.u32 %s21, 85
    %s23 = sshrl.u32 %s22, 1
    %s24 = sor.u32 %s22, %s23
    %s25 = sand.u32 51, %s24
    %s26 = sshrl.u32 %s25, 2
    %s27 = sor.u32 %s25, %s26
    %s28 = sand.u32 15, %s27
    %v29 = vld [vmem:[%s0] sm:%s28]
    %v30 = vunpack.c.l.bf16 %v29
    %v31 = vunpack.c.h.bf16 %v29
    %32 = vst [vmem:[#allocation1] sm:%s4] %v30
    %v33 = vld [vmem:[#allocation1] sm:$0xff]
    %vm34 = vcmask 261120
    %35 = vst.msk [vmem:[#allocation0] sm:$0x1] %vm34, %v33
    %s36 = scalar_lea.vmem [#allocation0], 31
    %37 = vst.msk [vmem:[%s36] sm:$0x2] %vm34, %v33
    %s38 = scalar_lea.vmem [#allocation0], 62
    %39 = vst.msk [vmem:[%s38] sm:$0x4] %vm34, %v33
    %s40 = scalar_lea.vmem [#allocation0], 93
    %41 = vst.msk [vmem:[%s40] sm:$0x8] %vm34, %v33
    %s42 = scalar_lea.vmem [#allocation0], 124
    %43 = vst.msk [vmem:[%s42] sm:$0x10] %vm34, %v33
    %s44 = scalar_lea.vmem [#allocation0], 155
    %45 = vst.msk [vmem:[%s44] sm:$0x20] %vm34, %v33
    %s46 = scalar_lea.vmem [#allocation0], 186
    %47 = vst.msk [vmem:[%s46] sm:$0x40] %vm34, %v33
    %s48 = scalar_lea.vmem [#allocation0], 217
    %49 = vst.msk [vmem:[%s48] sm:$0x80] %vm34, %v33
    %s50 = scalar_lea.vmem [#allocation1], 8
    %v51 = vld [vmem:[%s50] sm:$0xff]
    %vm52 = vcmask 261120
    %s53 = scalar_lea.vmem [#allocation0], 256
    %54 = vst.msk [vmem:[%s53] sm:$0x1] %vm52, %v51
    %s55 = scalar_lea.vmem [#allocation0], 287
    %56 = vst.msk [vmem:[%s55] sm:$0x2] %vm52, %v51
    %s57 = scalar_lea.vmem [#allocation0], 318
    %58 = vst.msk [vmem:[%s57] sm:$0x4] %vm52, %v51
    %s59 = scalar_lea.vmem [#allocation0], 349
    %60 = vst.msk [vmem:[%s59] sm:$0x8] %vm52, %v51
    %s61 = scalar_lea.vmem [#allocation0], 380
    %62 = vst.msk [vmem:[%s61] sm:$0x10] %vm52, %v51
    %s63 = scalar_lea.vmem [#allocation0], 411
    %64 = vst.msk [vmem:[%s63] sm:$0x20] %vm52, %v51
    %s65 = scalar_lea.vmem [#allocation0], 442
    %66 = vst.msk [vmem:[%s65] sm:$0x40] %vm52, %v51
    %s67 = scalar_lea.vmem [#allocation0], 473
    %68 = vst.msk [vmem:[%s67] sm:$0x80] %vm52, %v51
    %v69 = vld [vmem:[#allocation1] sm:$0xff]
    %70 = vrot.lane.b32.xlu0 %v69, 96
    %v71 = vpop.permute.xlu0 %70
    %vm72 = vcmask 261120
    %s73 = scalar_lea.vmem [#allocation0], 8
    %74 = vst.msk [vmem:[%s73] sm:$0x1] %vm72, %v71
    %s75 = scalar_lea.vmem [#allocation0], 39
    %76 = vst.msk [vmem:[%s75] sm:$0x2] %vm72, %v71
    %s77 = scalar_lea.vmem [#allocation0], 70
    %78 = vst.msk [vmem:[%s77] sm:$0x4] %vm72, %v71
    %s79 = scalar_lea.vmem [#allocation0], 101
    %80 = vst.msk [vmem:[%s79] sm:$0x8] %vm72, %v71
    %s81 = scalar_lea.vmem [#allocation0], 132
    %82 = vst.msk [vmem:[%s81] sm:$0x10] %vm72, %v71
    %s83 = scalar_lea.vmem [#allocation0], 163
    %84 = vst.msk [vmem:[%s83] sm:$0x20] %vm72, %v71
    %s85 = scalar_lea.vmem [#allocation0], 194
    %86 = vst.msk [vmem:[%s85] sm:$0x40] %vm72, %v71
    %s87 = scalar_lea.vmem [#allocation0], 225
    %88 = vst.msk [vmem:[%s87] sm:$0x80] %vm72, %v71
    %s89 = scalar_lea.vmem [#allocation1], 8
    %v90 = vld [vmem:[%s89] sm:$0xff]
    %91 = vrot.lane.b32.xlu0 %v90, 96
    %v92 = vpop.permute.xlu0 %91
    %vm93 = vcmask 261120
    %s94 = scalar_lea.vmem [#allocation0], 264
    %95 = vst.msk [vmem:[%s94] sm:$0x1] %vm93, %v92
    %s96 = scalar_lea.vmem [#allocation0], 295
    %97 = vst.msk [vmem:[%s96] sm:$0x2] %vm93, %v92
    %s98 = scalar_lea.vmem [#allocation0], 326
    %99 = vst.msk [vmem:[%s98] sm:$0x4] %vm93, %v92
    %s100 = scalar_lea.vmem [#allocation0], 357
    %101 = vst.msk [vmem:[%s100] sm:$0x8] %vm93, %v92
    %s102 = scalar_lea.vmem [#allocation0], 388
    %103 = vst.msk [vmem:[%s102] sm:$0x10] %vm93, %v92
    %s104 = scalar_lea.vmem [#allocation0], 419
    %105 = vst.msk [vmem:[%s104] sm:$0x20] %vm93, %v92
    %s106 = scalar_lea.vmem [#allocation0], 450
    %107 = vst.msk [vmem:[%s106] sm:$0x40] %vm93, %v92
    %s108 = scalar_lea.vmem [#allocation0], 481
    %109 = vst.msk [vmem:[%s108] sm:$0x80] %vm93, %v92
    %v110 = vld [vmem:[#allocation1] sm:$0xff]
    %111 = vrot.lane.b32.xlu0 %v110, 64
    %v112 = vpop.permute.xlu0 %111
    %vm113 = vcmask 261120
    %s114 = scalar_lea.vmem [#allocation0], 16
    %115 = vst.msk [vmem:[%s114] sm:$0x1] %vm113, %v112
    %s116 = scalar_lea.vmem [#allocation0], 47
    %117 = vst.msk [vmem:[%s116] sm:$0x2] %vm113, %v112
    %s118 = scalar_lea.vmem [#allocation0], 78
    %119 = vst.msk [vmem:[%s118] sm:$0x4] %vm113, %v112
    %s120 = scalar_lea.vmem [#allocation0], 109
    %121 = vst.msk [vmem:[%s120] sm:$0x8] %vm113, %v112
    %s122 = scalar_lea.vmem [#allocation0], 140
    %123 = vst.msk [vmem:[%s122] sm:$0x10] %vm113, %v112
    %s124 = scalar_lea.vmem [#allocation0], 171
    %125 = vst.msk [vmem:[%s124] sm:$0x20] %vm113, %v112
    %s126 = scalar_lea.vmem [#allocation0], 202
    %127 = vst.msk [vmem:[%s126] sm:$0x40] %vm113, %v112
    %s128 = scalar_lea.vmem [#allocation0], 233
    %129 = vst.msk [vmem:[%s128] sm:$0x80] %vm113, %v112
    %s130 = scalar_lea.vmem [#allocation1], 8
    %v131 = vld [vmem:[%s130] sm:$0xff]
    %132 = vrot.lane.b32.xlu0 %v131, 64
    %v133 = vpop.permute.xlu0 %132
    %vm134 = vcmask 261120
    %s135 = scalar_lea.vmem [#allocation0], 272
    %136 = vst.msk [vmem:[%s135] sm:$0x1] %vm134, %v133
    %s137 = scalar_lea.vmem [#allocation0], 303
    %138 = vst.msk [vmem:[%s137] sm:$0x2] %vm134, %v133
    %s139 = scalar_lea.vmem [#allocation0], 334
    %140 = vst.msk [vmem:[%s139] sm:$0x4] %vm134, %v133
    %s141 = scalar_lea.vmem [#allocation0], 365
    %142 = vst.msk [vmem:[%s141] sm:$0x8] %vm134, %v133
    %s143 = scalar_lea.vmem [#allocation0], 396
    %144 = vst.msk [vmem:[%s143] sm:$0x10] %vm134, %v133
    %s145 = scalar_lea.vmem [#allocation0], 427
    %146 = vst.msk [vmem:[%s145] sm:$0x20] %vm134, %v133
    %s147 = scalar_lea.vmem [#allocation0], 458
    %148 = vst.msk [vmem:[%s147] sm:$0x40] %vm134, %v133
    %s149 = scalar_lea.vmem [#allocation0], 489
    %150 = vst.msk [vmem:[%s149] sm:$0x80] %vm134, %v133
    %v151 = vld [vmem:[#allocation1] sm:$0xff]
    %152 = vrot.lane.b32.xlu0 %v151, 32
    %v153 = vpop.permute.xlu0 %152
    %vm154 = vcmask 261120
    %s155 = scalar_lea.vmem [#allocation0], 24
    %156 = vst.msk [vmem:[%s155] sm:$0x1] %vm154, %v153
    %s157 = scalar_lea.vmem [#allocation0], 55
    %158 = vst.msk [vmem:[%s157] sm:$0x2] %vm154, %v153
    %s159 = scalar_lea.vmem [#allocation0], 86
    %160 = vst.msk [vmem:[%s159] sm:$0x4] %vm154, %v153
    %s161 = scalar_lea.vmem [#allocation0], 117
    %162 = vst.msk [vmem:[%s161] sm:$0x8] %vm154, %v153
    %s163 = scalar_lea.vmem [#allocation0], 148
    %164 = vst.msk [vmem:[%s163] sm:$0x10] %vm154, %v153
    %s165 = scalar_lea.vmem [#allocation0], 179
    %166 = vst.msk [vmem:[%s165] sm:$0x20] %vm154, %v153
    %s167 = scalar_lea.vmem [#allocation0], 210
    %168 = vst.msk [vmem:[%s167] sm:$0x40] %vm154, %v153
    %s169 = scalar_lea.vmem [#allocation0], 241
    %170 = vst.msk [vmem:[%s169] sm:$0x80] %vm154, %v153
    %s171 = scalar_lea.vmem [#allocation1], 8
    %v172 = vld [vmem:[%s171] sm:$0xff]
    %173 = vrot.lane.b32.xlu0 %v172, 32
    %v174 = vpop.permute.xlu0 %173
    %vm175 = vcmask 261120
    %s176 = scalar_lea.vmem [#allocation0], 280
    %177 = vst.msk [vmem:[%s176] sm:$0x1] %vm175, %v174
    %s178 = scalar_lea.vmem [#allocation0], 311
    %179 = vst.msk [vmem:[%s178] sm:$0x2] %vm175, %v174
    %s180 = scalar_lea.vmem [#allocation0], 342
    %181 = vst.msk [vmem:[%s180] sm:$0x4] %vm175, %v174
    %s182 = scalar_lea.vmem [#allocation0], 373
    %183 = vst.msk [vmem:[%s182] sm:$0x8] %vm175, %v174
    %s184 = scalar_lea.vmem [#allocation0], 404
    %185 = vst.msk [vmem:[%s184] sm:$0x10] %vm175, %v174
    %s186 = scalar_lea.vmem [#allocation0], 435
    %187 = vst.msk [vmem:[%s186] sm:$0x20] %vm175, %v174
    %s188 = scalar_lea.vmem [#allocation0], 466
    %189 = vst.msk [vmem:[%s188] sm:$0x40] %vm175, %v174
    %s190 = scalar_lea.vmem [#allocation0], 497
    %191 = vst.msk [vmem:[%s190] sm:$0x80] %vm175, %v174
    %s193 = smul.u32 1, 2
    %s194 = sshllo.u32 0, %s193
    %s195 = sshrl.u32 %s193, 1
    %v196 = vld [vmem:[#allocation0] sm:%s194]
    %v197 = vpack.c.bf16 0.0, %v196
    %s198 = sshllo.u32 0, %s195
    %199 = vst [vmem:[%s1] sm:%s198] %v197
    %s200 = scalar_lea.vmem [#allocation0], 8
    %v201 = vld [vmem:[%s200] sm:%s194]
    %v202 = vpack.c.bf16 0.0, %v201
    %s203 = sshllo.u32 0, %s195
    %s204 = scalar_lea.vmem %s1, 1
    %205 = vst [vmem:[%s204] sm:%s203] %v202
    %s206 = scalar_lea.vmem [#allocation0], 16
    %v207 = vld [vmem:[%s206] sm:%s194]
    %v208 = vpack.c.bf16 0.0, %v207
    %s209 = sshllo.u32 0, %s195
    %s210 = smul.addr 1, 2
    %s211 = scalar_lea.vmem %s1, %s210
    %212 = vst [vmem:[%s211] sm:%s209] %v208
    %s213 = scalar_lea.vmem [#allocation0], 24
    %v214 = vld [vmem:[%s213] sm:%s194]
    %v215 = vpack.c.bf16 0.0, %v214
    %s216 = sshllo.u32 0, %s195
    %s217 = smul.addr 1, 3
    %s218 = scalar_lea.vmem %s1, %s217
    %219 = vst [vmem:[%s218] sm:%s216] %v215
    %s220 = scalar_lea.vmem [#allocation0], 32
    %v221 = vld [vmem:[%s220] sm:%s194]
    %v222 = vpack.c.bf16 0.0, %v221
    %s223 = sshllo.u32 0, %s195
    %s224 = smul.addr 1, 4
    %s225 = scalar_lea.vmem %s1, %s224
    %226 = vst [vmem:[%s225] sm:%s223] %v222
    %s227 = scalar_lea.vmem [#allocation0], 40
    %v228 = vld [vmem:[%s227] sm:%s194]
    %v229 = vpack.c.bf16 0.0, %v228
    %s230 = sshllo.u32 0, %s195
    %s231 = smul.addr 1, 5
    %s232 = scalar_lea.vmem %s1, %s231
    %233 = vst [vmem:[%s232] sm:%s230] %v229
    %s234 = scalar_lea.vmem [#allocation0], 48
    %v235 = vld [vmem:[%s234] sm:%s194]
    %v236 = vpack.c.bf16 0.0, %v235
    %s237 = sshllo.u32 0, %s195
    %s238 = smul.addr 1, 6
    %s239 = scalar_lea.vmem %s1, %s238
    %240 = vst [vmem:[%s239] sm:%s237] %v236
    %s241 = scalar_lea.vmem [#allocation0], 56
    %v242 = vld [vmem:[%s241] sm:%s194]
    %v243 = vpack.c.bf16 0.0, %v242
    %s244 = sshllo.u32 0, %s195
    %s245 = smul.addr 1, 7
    %s246 = scalar_lea.vmem %s1, %s245
    %247 = vst [vmem:[%s246] sm:%s244] %v243
    %s248 = scalar_lea.vmem [#allocation0], 64
    %v249 = vld [vmem:[%s248] sm:%s194]
    %v250 = vpack.c.bf16 0.0, %v249
    %s251 = sshllo.u32 0, %s195
    %s252 = smul.addr 1, 8
    %s253 = scalar_lea.vmem %s1, %s252
    %254 = vst [vmem:[%s253] sm:%s251] %v250
    %s255 = scalar_lea.vmem [#allocation0], 72
    %v256 = vld [vmem:[%s255] sm:%s194]
    %v257 = vpack.c.bf16 0.0, %v256
    %s258 = sshllo.u32 0, %s195
    %s259 = smul.addr 1, 9
    %s260 = scalar_lea.vmem %s1, %s259
    %261 = vst [vmem:[%s260] sm:%s258] %v257
    %s262 = scalar_lea.vmem [#allocation0], 80
    %v263 = vld [vmem:[%s262] sm:%s194]
    %v264 = vpack.c.bf16 0.0, %v263
    %s265 = sshllo.u32 0, %s195
    %s266 = smul.addr 1, 10
    %s267 = scalar_lea.vmem %s1, %s266
    %268 = vst [vmem:[%s267] sm:%s265] %v264
    %s269 = scalar_lea.vmem [#allocation0], 88
    %v270 = vld [vmem:[%s269] sm:%s194]
    %v271 = vpack.c.bf16 0.0, %v270
    %s272 = sshllo.u32 0, %s195
    %s273 = smul.addr 1, 11
    %s274 = scalar_lea.vmem %s1, %s273
    %275 = vst [vmem:[%s274] sm:%s272] %v271
    %s276 = scalar_lea.vmem [#allocation0], 96
    %v277 = vld [vmem:[%s276] sm:%s194]
    %v278 = vpack.c.bf16 0.0, %v277
    %s279 = sshllo.u32 0, %s195
    %s280 = smul.addr 1, 12
    %s281 = scalar_lea.vmem %s1, %s280
    %282 = vst [vmem:[%s281] sm:%s279] %v278
    %s283 = scalar_lea.vmem [#allocation0], 104
    %v284 = vld [vmem:[%s283] sm:%s194]
    %v285 = vpack.c.bf16 0.0, %v284
    %s286 = sshllo.u32 0, %s195
    %s287 = smul.addr 1, 13
    %s288 = scalar_lea.vmem %s1, %s287
    %289 = vst [vmem:[%s288] sm:%s286] %v285
    %s290 = scalar_lea.vmem [#allocation0], 112
    %v291 = vld [vmem:[%s290] sm:%s194]
    %v292 = vpack.c.bf16 0.0, %v291
    %s293 = sshllo.u32 0, %s195
    %s294 = smul.addr 1, 14
    %s295 = scalar_lea.vmem %s1, %s294
    %296 = vst [vmem:[%s295] sm:%s293] %v292
    %s297 = scalar_lea.vmem [#allocation0], 120
    %v298 = vld [vmem:[%s297] sm:%s194]
    %v299 = vpack.c.bf16 0.0, %v298
    %s300 = sshllo.u32 0, %s195
    %s301 = smul.addr 1, 15
    %s302 = scalar_lea.vmem %s1, %s301
    %303 = vst [vmem:[%s302] sm:%s300] %v299
    %s304 = scalar_lea.vmem [#allocation0], 128
    %v305 = vld [vmem:[%s304] sm:%s194]
    %v306 = vpack.c.bf16 0.0, %v305
    %s307 = sshllo.u32 0, %s195
    %s308 = smul.addr 1, 16
    %s309 = scalar_lea.vmem %s1, %s308
    %310 = vst [vmem:[%s309] sm:%s307] %v306
    %s311 = scalar_lea.vmem [#allocation0], 136
    %v312 = vld [vmem:[%s311] sm:%s194]
    %v313 = vpack.c.bf16 0.0, %v312
    %s314 = sshllo.u32 0, %s195
    %s315 = smul.addr 1, 17
    %s316 = scalar_lea.vmem %s1, %s315
    %317 = vst [vmem:[%s316] sm:%s314] %v313
    %s318 = scalar_lea.vmem [#allocation0], 144
    %v319 = vld [vmem:[%s318] sm:%s194]
    %v320 = vpack.c.bf16 0.0, %v319
    %s321 = sshllo.u32 0, %s195
    %s322 = smul.addr 1, 18
    %s323 = scalar_lea.vmem %s1, %s322
    %324 = vst [vmem:[%s323] sm:%s321] %v320
    %s325 = scalar_lea.vmem [#allocation0], 152
    %v326 = vld [vmem:[%s325] sm:%s194]
    %v327 = vpack.c.bf16 0.0, %v326
    %s328 = sshllo.u32 0, %s195
    %s329 = smul.addr 1, 19
    %s330 = scalar_lea.vmem %s1, %s329
    %331 = vst [vmem:[%s330] sm:%s328] %v327
    %s332 = scalar_lea.vmem [#allocation0], 160
    %v333 = vld [vmem:[%s332] sm:%s194]
    %v334 = vpack.c.bf16 0.0, %v333
    %s335 = sshllo.u32 0, %s195
    %s336 = smul.addr 1, 20
    %s337 = scalar_lea.vmem %s1, %s336
    %338 = vst [vmem:[%s337] sm:%s335] %v334
    %s339 = scalar_lea.vmem [#allocation0], 168
    %v340 = vld [vmem:[%s339] sm:%s194]
    %v341 = vpack.c.bf16 0.0, %v340
    %s342 = sshllo.u32 0, %s195
    %s343 = smul.addr 1, 21
    %s344 = scalar_lea.vmem %s1, %s343
    %345 = vst [vmem:[%s344] sm:%s342] %v341
    %s346 = scalar_lea.vmem [#allocation0], 176
    %v347 = vld [vmem:[%s346] sm:%s194]
    %v348 = vpack.c.bf16 0.0, %v347
    %s349 = sshllo.u32 0, %s195
    %s350 = smul.addr 1, 22
    %s351 = scalar_lea.vmem %s1, %s350
    %352 = vst [vmem:[%s351] sm:%s349] %v348
    %s353 = scalar_lea.vmem [#allocation0], 184
    %v354 = vld [vmem:[%s353] sm:%s194]
    %v355 = vpack.c.bf16 0.0, %v354
    %s356 = sshllo.u32 0, %s195
    %s357 = smul.addr 1, 23
    %s358 = scalar_lea.vmem %s1, %s357
    %359 = vst [vmem:[%s358] sm:%s356] %v355
    %s360 = scalar_lea.vmem [#allocation0], 192
    %v361 = vld [vmem:[%s360] sm:%s194]
    %v362 = vpack.c.bf16 0.0, %v361
    %s363 = sshllo.u32 0, %s195
    %s364 = smul.addr 1, 24
    %s365 = scalar_lea.vmem %s1, %s364
    %366 = vst [vmem:[%s365] sm:%s363] %v362
    %s367 = scalar_lea.vmem [#allocation0], 200
    %v368 = vld [vmem:[%s367] sm:%s194]
    %v369 = vpack.c.bf16 0.0, %v368
    %s370 = sshllo.u32 0, %s195
    %s371 = smul.addr 1, 25
    %s372 = scalar_lea.vmem %s1, %s371
    %373 = vst [vmem:[%s372] sm:%s370] %v369
    %s374 = scalar_lea.vmem [#allocation0], 208
    %v375 = vld [vmem:[%s374] sm:%s194]
    %v376 = vpack.c.bf16 0.0, %v375
    %s377 = sshllo.u32 0, %s195
    %s378 = smul.addr 1, 26
    %s379 = scalar_lea.vmem %s1, %s378
    %380 = vst [vmem:[%s379] sm:%s377] %v376
    %s381 = scalar_lea.vmem [#allocation0], 216
    %v382 = vld [vmem:[%s381] sm:%s194]
    %v383 = vpack.c.bf16 0.0, %v382
    %s384 = sshllo.u32 0, %s195
    %s385 = smul.addr 1, 27
    %s386 = scalar_lea.vmem %s1, %s385
    %387 = vst [vmem:[%s386] sm:%s384] %v383
    %s388 = scalar_lea.vmem [#allocation0], 224
    %v389 = vld [vmem:[%s388] sm:%s194]
    %v390 = vpack.c.bf16 0.0, %v389
    %s391 = sshllo.u32 0, %s195
    %s392 = smul.addr 1, 28
    %s393 = scalar_lea.vmem %s1, %s392
    %394 = vst [vmem:[%s393] sm:%s391] %v390
    %s395 = scalar_lea.vmem [#allocation0], 232
    %v396 = vld [vmem:[%s395] sm:%s194]
    %v397 = vpack.c.bf16 0.0, %v396
    %s398 = sshllo.u32 0, %s195
    %s399 = smul.addr 1, 29
    %s400 = scalar_lea.vmem %s1, %s399
    %401 = vst [vmem:[%s400] sm:%s398] %v397
    %s402 = scalar_lea.vmem [#allocation0], 240
    %v403 = vld [vmem:[%s402] sm:%s194]
    %v404 = vpack.c.bf16 0.0, %v403
    %s405 = sshllo.u32 0, %s195
    %s406 = smul.addr 1, 30
    %s407 = scalar_lea.vmem %s1, %s406
    %408 = vst [vmem:[%s407] sm:%s405] %v404
    %s409 = scalar_lea.vmem [#allocation0], 248
    %v410 = vld [vmem:[%s409] sm:%s194]
    %v411 = vpack.c.bf16 0.0, %v410
    %s412 = sshllo.u32 0, %s195
    %s413 = smul.addr 1, 31
    %s414 = scalar_lea.vmem %s1, %s413
    %415 = vst [vmem:[%s414] sm:%s412] %v411
    %s416 = scalar_lea.vmem [#allocation0], 256
    %v417 = vld [vmem:[%s416] sm:%s194]
    %v418 = vpack.c.bf16 0.0, %v417
    %s419 = sshllo.u32 0, %s195
    %s420 = smul.addr 1, 32
    %s421 = scalar_lea.vmem %s1, %s420
    %422 = vst [vmem:[%s421] sm:%s419] %v418
    %s423 = scalar_lea.vmem [#allocation0], 264
    %v424 = vld [vmem:[%s423] sm:%s194]
    %v425 = vpack.c.bf16 0.0, %v424
    %s426 = sshllo.u32 0, %s195
    %s427 = smul.addr 1, 33
    %s428 = scalar_lea.vmem %s1, %s427
    %429 = vst [vmem:[%s428] sm:%s426] %v425
    %s430 = scalar_lea.vmem [#allocation0], 272
    %v431 = vld [vmem:[%s430] sm:%s194]
    %v432 = vpack.c.bf16 0.0, %v431
    %s433 = sshllo.u32 0, %s195
    %s434 = smul.addr 1, 34
    %s435 = scalar_lea.vmem %s1, %s434
    %436 = vst [vmem:[%s435] sm:%s433] %v432
    %s437 = scalar_lea.vmem [#allocation0], 280
    %v438 = vld [vmem:[%s437] sm:%s194]
    %v439 = vpack.c.bf16 0.0, %v438
    %s440 = sshllo.u32 0, %s195
    %s441 = smul.addr 1, 35
    %s442 = scalar_lea.vmem %s1, %s441
    %443 = vst [vmem:[%s442] sm:%s440] %v439
    %s444 = scalar_lea.vmem [#allocation0], 288
    %v445 = vld [vmem:[%s444] sm:%s194]
    %v446 = vpack.c.bf16 0.0, %v445
    %s447 = sshllo.u32 0, %s195
    %s448 = smul.addr 1, 36
    %s449 = scalar_lea.vmem %s1, %s448
    %450 = vst [vmem:[%s449] sm:%s447] %v446
    %s451 = scalar_lea.vmem [#allocation0], 296
    %v452 = vld [vmem:[%s451] sm:%s194]
    %v453 = vpack.c.bf16 0.0, %v452
    %s454 = sshllo.u32 0, %s195
    %s455 = smul.addr 1, 37
    %s456 = scalar_lea.vmem %s1, %s455
    %457 = vst [vmem:[%s456] sm:%s454] %v453
    %s458 = scalar_lea.vmem [#allocation0], 304
    %v459 = vld [vmem:[%s458] sm:%s194]
    %v460 = vpack.c.bf16 0.0, %v459
    %s461 = sshllo.u32 0, %s195
    %s462 = smul.addr 1, 38
    %s463 = scalar_lea.vmem %s1, %s462
    %464 = vst [vmem:[%s463] sm:%s461] %v460
    %s465 = scalar_lea.vmem [#allocation0], 312
    %v466 = vld [vmem:[%s465] sm:%s194]
    %v467 = vpack.c.bf16 0.0, %v466
    %s468 = sshllo.u32 0, %s195
    %s469 = smul.addr 1, 39
    %s470 = scalar_lea.vmem %s1, %s469
    %471 = vst [vmem:[%s470] sm:%s468] %v467
    %s472 = scalar_lea.vmem [#allocation0], 320
    %v473 = vld [vmem:[%s472] sm:%s194]
    %v474 = vpack.c.bf16 0.0, %v473
    %s475 = sshllo.u32 0, %s195
    %s476 = smul.addr 1, 40
    %s477 = scalar_lea.vmem %s1, %s476
    %478 = vst [vmem:[%s477] sm:%s475] %v474
    %s479 = scalar_lea.vmem [#allocation0], 328
    %v480 = vld [vmem:[%s479] sm:%s194]
    %v481 = vpack.c.bf16 0.0, %v480
    %s482 = sshllo.u32 0, %s195
    %s483 = smul.addr 1, 41
    %s484 = scalar_lea.vmem %s1, %s483
    %485 = vst [vmem:[%s484] sm:%s482] %v481
    %s486 = scalar_lea.vmem [#allocation0], 336
    %v487 = vld [vmem:[%s486] sm:%s194]
    %v488 = vpack.c.bf16 0.0, %v487
    %s489 = sshllo.u32 0, %s195
    %s490 = smul.addr 1, 42
    %s491 = scalar_lea.vmem %s1, %s490
    %492 = vst [vmem:[%s491] sm:%s489] %v488
    %s493 = scalar_lea.vmem [#allocation0], 344
    %v494 = vld [vmem:[%s493] sm:%s194]
    %v495 = vpack.c.bf16 0.0, %v494
    %s496 = sshllo.u32 0, %s195
    %s497 = smul.addr 1, 43
    %s498 = scalar_lea.vmem %s1, %s497
    %499 = vst [vmem:[%s498] sm:%s496] %v495
    %s500 = scalar_lea.vmem [#allocation0], 352
    %v501 = vld [vmem:[%s500] sm:%s194]
    %v502 = vpack.c.bf16 0.0, %v501
    %s503 = sshllo.u32 0, %s195
    %s504 = smul.addr 1, 44
    %s505 = scalar_lea.vmem %s1, %s504
    %506 = vst [vmem:[%s505] sm:%s503] %v502
    %s507 = scalar_lea.vmem [#allocation0], 360
    %v508 = vld [vmem:[%s507] sm:%s194]
    %v509 = vpack.c.bf16 0.0, %v508
    %s510 = sshllo.u32 0, %s195
    %s511 = smul.addr 1, 45
    %s512 = scalar_lea.vmem %s1, %s511
    %513 = vst [vmem:[%s512] sm:%s510] %v509
    %s514 = scalar_lea.vmem [#allocation0], 368
    %v515 = vld [vmem:[%s514] sm:%s194]
    %v516 = vpack.c.bf16 0.0, %v515
    %s517 = sshllo.u32 0, %s195
    %s518 = smul.addr 1, 46
    %s519 = scalar_lea.vmem %s1, %s518
    %520 = vst [vmem:[%s519] sm:%s517] %v516
    %s521 = scalar_lea.vmem [#allocation0], 376
    %v522 = vld [vmem:[%s521] sm:%s194]
    %v523 = vpack.c.bf16 0.0, %v522
    %s524 = sshllo.u32 0, %s195
    %s525 = smul.addr 1, 47
    %s526 = scalar_lea.vmem %s1, %s525
    %527 = vst [vmem:[%s526] sm:%s524] %v523
    %s528 = scalar_lea.vmem [#allocation0], 384
    %v529 = vld [vmem:[%s528] sm:%s194]
    %v530 = vpack.c.bf16 0.0, %v529
    %s531 = sshllo.u32 0, %s195
    %s532 = smul.addr 1, 48
    %s533 = scalar_lea.vmem %s1, %s532
    %534 = vst [vmem:[%s533] sm:%s531] %v530
    %s535 = scalar_lea.vmem [#allocation0], 392
    %v536 = vld [vmem:[%s535] sm:%s194]
    %v537 = vpack.c.bf16 0.0, %v536
    %s538 = sshllo.u32 0, %s195
    %s539 = smul.addr 1, 49
    %s540 = scalar_lea.vmem %s1, %s539
    %541 = vst [vmem:[%s540] sm:%s538] %v537
    %s542 = scalar_lea.vmem [#allocation0], 400
    %v543 = vld [vmem:[%s542] sm:%s194]
    %v544 = vpack.c.bf16 0.0, %v543
    %s545 = sshllo.u32 0, %s195
    %s546 = smul.addr 1, 50
    %s547 = scalar_lea.vmem %s1, %s546
    %548 = vst [vmem:[%s547] sm:%s545] %v544
    %s549 = scalar_lea.vmem [#allocation0], 408
    %v550 = vld [vmem:[%s549] sm:%s194]
    %v551 = vpack.c.bf16 0.0, %v550
    %s552 = sshllo.u32 0, %s195
    %s553 = smul.addr 1, 51
    %s554 = scalar_lea.vmem %s1, %s553
    %555 = vst [vmem:[%s554] sm:%s552] %v551
    %s556 = scalar_lea.vmem [#allocation0], 416
    %v557 = vld [vmem:[%s556] sm:%s194]
    %v558 = vpack.c.bf16 0.0, %v557
    %s559 = sshllo.u32 0, %s195
    %s560 = smul.addr 1, 52
    %s561 = scalar_lea.vmem %s1, %s560
    %562 = vst [vmem:[%s561] sm:%s559] %v558
    %s563 = scalar_lea.vmem [#allocation0], 424
    %v564 = vld [vmem:[%s563] sm:%s194]
    %v565 = vpack.c.bf16 0.0, %v564
    %s566 = sshllo.u32 0, %s195
    %s567 = smul.addr 1, 53
    %s568 = scalar_lea.vmem %s1, %s567
    %569 = vst [vmem:[%s568] sm:%s566] %v565
    %s570 = scalar_lea.vmem [#allocation0], 432
    %v571 = vld [vmem:[%s570] sm:%s194]
    %v572 = vpack.c.bf16 0.0, %v571
    %s573 = sshllo.u32 0, %s195
    %s574 = smul.addr 1, 54
    %s575 = scalar_lea.vmem %s1, %s574
    %576 = vst [vmem:[%s575] sm:%s573] %v572
    %s577 = scalar_lea.vmem [#allocation0], 440
    %v578 = vld [vmem:[%s577] sm:%s194]
    %v579 = vpack.c.bf16 0.0, %v578
    %s580 = sshllo.u32 0, %s195
    %s581 = smul.addr 1, 55
    %s582 = scalar_lea.vmem %s1, %s581
    %583 = vst [vmem:[%s582] sm:%s580] %v579
    %s584 = scalar_lea.vmem [#allocation0], 448
    %v585 = vld [vmem:[%s584] sm:%s194]
    %v586 = vpack.c.bf16 0.0, %v585
    %s587 = sshllo.u32 0, %s195
    %s588 = smul.addr 1, 56
    %s589 = scalar_lea.vmem %s1, %s588
    %590 = vst [vmem:[%s589] sm:%s587] %v586
    %s591 = scalar_lea.vmem [#allocation0], 456
    %v592 = vld [vmem:[%s591] sm:%s194]
    %v593 = vpack.c.bf16 0.0, %v592
    %s594 = sshllo.u32 0, %s195
    %s595 = smul.addr 1, 57
    %s596 = scalar_lea.vmem %s1, %s595
    %597 = vst [vmem:[%s596] sm:%s594] %v593
    %s598 = scalar_lea.vmem [#allocation0], 464
    %v599 = vld [vmem:[%s598] sm:%s194]
    %v600 = vpack.c.bf16 0.0, %v599
    %s601 = sshllo.u32 0, %s195
    %s602 = smul.addr 1, 58
    %s603 = scalar_lea.vmem %s1, %s602
    %604 = vst [vmem:[%s603] sm:%s601] %v600
    %s605 = scalar_lea.vmem [#allocation0], 472
    %v606 = vld [vmem:[%s605] sm:%s194]
    %v607 = vpack.c.bf16 0.0, %v606
    %s608 = sshllo.u32 0, %s195
    %s609 = smul.addr 1, 59
    %s610 = scalar_lea.vmem %s1, %s609
    %611 = vst [vmem:[%s610] sm:%s608] %v607
    %s612 = scalar_lea.vmem [#allocation0], 480
    %v613 = vld [vmem:[%s612] sm:%s194]
    %v614 = vpack.c.bf16 0.0, %v613
    %s615 = sshllo.u32 0, %s195
    %s616 = smul.addr 1, 60
    %s617 = scalar_lea.vmem %s1, %s616
    %618 = vst [vmem:[%s617] sm:%s615] %v614
    %s619 = scalar_lea.vmem [#allocation0], 488
    %v620 = vld [vmem:[%s619] sm:%s194]
    %v621 = vpack.c.bf16 0.0, %v620
    %s622 = sshllo.u32 0, %s195
    %s623 = smul.addr 1, 61
    %s624 = scalar_lea.vmem %s1, %s623
    %625 = vst [vmem:[%s624] sm:%s622] %v621
    %s626 = scalar_lea.vmem [#allocation0], 496
    %v627 = vld [vmem:[%s626] sm:%s194]
    %v628 = vpack.c.bf16 0.0, %v627
    %s629 = sshllo.u32 0, %s195
    %s630 = smul.addr 1, 62
    %s631 = scalar_lea.vmem %s1, %s630
    %632 = vst [vmem:[%s631] sm:%s629] %v628
    %s633 = scalar_lea.vmem [#allocation0], 504
    %v634 = vld [vmem:[%s633] sm:%s194]
    %v635 = vpack.c.bf16 0.0, %v634
    %s636 = sshllo.u32 0, %s195
    %s637 = smul.addr 1, 63
    %s638 = scalar_lea.vmem %s1, %s637
    %639 = vst [vmem:[%s638] sm:%s636] %v635

// kernel: squeeze.14
$region0: #{squeeze.14}
  %s0 = inlined_call_operand.vmem [shape: f32[128], index: 0, kind: input, shape index: {}]
  %s1 = inlined_call_operand.vmem [shape: f32[4,1,32], index: 1, kind: output, shape index: {}]
  $region1: #{squeeze.14} parent=0
    #allocation0 [shape = 'u8[4096]{0}', space=vmem, size = 0x1000, scoped, tag = 'scoped mem for output reshape']
    #allocation1 [shape = 'u8[4096]{0}', space=vmem, size = 0x1000, scoped, tag = 'scoped mem for input reshape']
    %s3 = sshllo.u32 0, 1
    %v4 = vld [vmem:[%s0] sm:%s3]
    %5 = vst [vmem:[#allocation1] sm:%s3] %v4
    %v6 = vld [vmem:[#allocation1] sm:$0x1]
    %vm7 = vcmask 261120
    %8 = vst.msk [vmem:[#allocation0] sm:$0x1] %vm7, %v6
    %v9 = vld [vmem:[#allocation1] sm:$0x1]
    %10 = vrot.lane.b32.xlu0 %v9, 96
    %v11 = vpop.permute.xlu0 %10
    %vm12 = vcmask 261120
    %s13 = scalar_lea.vmem [#allocation0], 1
    %14 = vst.msk [vmem:[%s13] sm:$0x1] %vm12, %v11
    %v15 = vld [vmem:[#allocation1] sm:$0x1]
    %16 = vrot.lane.b32.xlu0 %v15, 64
    %v17 = vpop.permute.xlu0 %16
    %vm18 = vcmask 261120
    %s19 = scalar_lea.vmem [#allocation0], 2
    %20 = vst.msk [vmem:[%s19] sm:$0x1] %vm18, %v17
    %v21 = vld [vmem:[#allocation1] sm:$0x1]
    %22 = vrot.lane.b32.xlu0 %v21, 32
    %v23 = vpop.permute.xlu0 %22
    %vm24 = vcmask 261120
    %s25 = scalar_lea.vmem [#allocation0], 3
    %26 = vst.msk [vmem:[%s25] sm:$0x1] %vm24, %v23
    %s28 = sshllo.u32 0, 4
    %v30 = vld [vmem:[#allocation0] sm:%s28]
    %s31 = sshllo.u32 0, 4
    %32 = vst [vmem:[%s1] sm:%s31] %v30

// kernel: lstm_forward.1
$region0: #{lstm_forward.1}
  #allocation0 [shape = 'u32[]', space=smem, size = 0x4, offset = 0x4, fixed_abs, tag = 'smem constant byte address 0x4 - core index']
  #allocation1 [shape = 'u32[144,128]{1,0:T(1,128)}', space=vmem, size = 0x12000, scoped, tag = 'internal scratch']
  #allocation2 [shape = 'f32[8,8,256]{2,1,0:T(8,128)}', space=vmem, size = 0x10000, scoped, tag = 'scratch operand']
  #allocation3 [shape = 'f32[8,8,32]{2,1,0:T(8,128)}', space=vmem, size = 0x8000, scoped, tag = 'scratch operand']
  #allocation4 [shape = 'f32[8,8,32]{2,1,0:T(8,128)}', space=vmem, size = 0x8000, scoped, tag = 'scratch operand']
  %s0 = inlined_call_operand.vmem [shape: bf16[64,32], index: 0, kind: input, shape index: {}]
  %s1 = inlined_call_operand.vmem [shape: f32[8,8,64], index: 1, kind: input, shape index: {}]
  %s2 = inlined_call_operand.vmem [shape: bf16[32,256], index: 2, kind: input, shape index: {}]
  %s3 = inlined_call_operand.vmem [shape: bf16[64,256], index: 3, kind: input, shape index: {}]
  %s4 = inlined_call_operand.vmem [shape: f32[1,256], index: 4, kind: input, shape index: {}]
  %s5 = inlined_call_operand.vmem [shape: f32[8,64], index: 5, kind: input, shape index: {}]
  %s6 = inlined_call_operand.vmem [shape: f32[8,64], index: 6, kind: input, shape index: {}]
  %s7 = inlined_call_operand.vmem [shape: f32[8,8,32], index: 7, kind: output, shape index: {0}]
  %s8 = inlined_call_operand.vmem [shape: f32[2,8,32], index: 8, kind: output, shape index: {1}]
  %s9 = inlined_call_operand.vmem [shape: f32[2,8,32], index: 9, kind: output, shape index: {2}]
  %10 = xla_tuple %s7, %s8, %s9
  %s11 = sld [smem:[#allocation0]]
  $region54: #{lstm_forward.1} parent=0
    _
  %s13 = ssub.s32 1, %s11
  %s14 = scalar_select 0, %s13, %s11
  // Predicated region
  $region2: #{lstm_forward.1} parent=0 // pred_check
    _
  $region3: #{lstm_forward.1} parent=0 // pred_check_branch
    %16 = sbr.rel (0) target = $region5
  $region4: #{lstm_forward.1} parent=0 // pred_region
    _
  $region5: #{lstm_forward.1} parent=0 // pred_fallthru
    _
  // Predicated region
  $region6: #{lstm_forward.1} parent=0 // pred_check
    _
  $region7: #{lstm_forward.1} parent=0 // pred_check_branch
    %18 = sbr.rel (0) target = $region9
  $region8: #{lstm_forward.1} parent=0 // pred_region
    _
  $region9: #{lstm_forward.1} parent=0 // pred_fallthru
    _
  // Predicated region
  $region10: #{lstm_forward.1} parent=0 // pred_check
    _
  $region11: #{lstm_forward.1} parent=0 // pred_check_branch
    %20 = sbr.rel (0) target = $region13
  $region12: #{lstm_forward.1} parent=0 // pred_region
    _
  $region13: #{lstm_forward.1} parent=0 // pred_fallthru
    _
  // Predicated region
  $region14: #{lstm_forward.1} parent=0 // pred_check
    _
  $region15: #{lstm_forward.1} parent=0 // pred_check_branch
    %22 = sbr.rel (0) target = $region17
  $region16: #{lstm_forward.1} parent=0 // pred_region
    _
  $region17: #{lstm_forward.1} parent=0 // pred_fallthru
    _
  // Predicated region
  $region18: #{lstm_forward.1} parent=0 // pred_check
    _
  $region19: #{lstm_forward.1} parent=0 // pred_check_branch
    %24 = sbr.rel (0) target = $region21
  $region20: #{lstm_forward.1} parent=0 // pred_region
    _
  $region21: #{lstm_forward.1} parent=0 // pred_fallthru
    _
  // Predicated region
  $region22: #{lstm_forward.1} parent=0 // pred_check
    _
  $region23: #{lstm_forward.1} parent=0 // pred_check_branch
    %26 = sbr.rel (0) target = $region25
  $region24: #{lstm_forward.1} parent=0 // pred_region
    _
  $region25: #{lstm_forward.1} parent=0 // pred_fallthru
    _
  // Predicated region
  $region26: #{lstm_forward.1} parent=0 // pred_check
    _
  $region27: #{lstm_forward.1} parent=0 // pred_check_branch
    %28 = sbr.rel (0) target = $region29
  $region28: #{lstm_forward.1} parent=0 // pred_region
    _
  $region29: #{lstm_forward.1} parent=0 // pred_fallthru
    _
  %v30 = vld [vmem:[%s0] sm:$0xf]
  %v31 = vld [vmem:[%s0 + $0x4] sm:$0xf]
  %v32 = vld [vmem:[%s0 + $0x8] sm:$0xf]
  %v33 = vld [vmem:[%s0 + $0xc] sm:$0xf]
  %v34 = vld [vmem:[%s0 + $0x10] sm:$0xf]
  %v35 = vld [vmem:[%s0 + $0x14] sm:$0xf]
  %v36 = vld [vmem:[%s0 + $0x18] sm:$0xf]
  %v37 = vld [vmem:[%s0 + $0x1c] sm:$0xf]
  %v38 = vld [vmem:[%s2] sm:$0xff]
  %v39 = vld [vmem:[%s2 + $0x8] sm:$0xff]
  %v40 = vld [vmem:[%s2 + $0x10] sm:$0xff]
  %v41 = vld [vmem:[%s2 + $0x18] sm:$0xff]
  %v42 = vld [vmem:[%s4] sm:$0x3]
  %v44 = vlaneseq
  %v45 = vshrl.u32 %v44, 7
  %v46 = vsub.s32 0, %v45
  %v47 = vrot.slane %v42, %v46
  %v48 = vlaneseq
  %v49 = vshrl.u32 %v48, 7
  %v50 = vsub.s32 1, %v49
  %v51 = vrot.slane %v42, %v50
  %v62 = vunpack.c.l.b16 %v30
  %v63 = vunpack.c.l.b16 %v31
  %v64 = vunpack.c.l.b16 %v32
  %v65 = vunpack.c.l.b16 %v33
  %v66 = vunpack.c.l.b16 %v34
  %v67 = vunpack.c.l.b16 %v35
  %v68 = vunpack.c.l.b16 %v36
  %v69 = vunpack.c.l.b16 %v37
  %v70 = vpack.c.b16 %v63, %v62
  %v71 = vpack.c.b16 %v65, %v64
  %v72 = vpack.c.b16 %v67, %v66
  %v73 = vpack.c.b16 %v69, %v68
  %v78 = vunpack.c.l.b16 %v38
  %v79 = vunpack.c.h.b16 %v38
  %v80 = vunpack.c.l.b16 %v39
  %v81 = vunpack.c.h.b16 %v39
  %v82 = vunpack.c.l.b16 %v40
  %v83 = vunpack.c.h.b16 %v40
  %v84 = vunpack.c.l.b16 %v41
  %v85 = vunpack.c.h.b16 %v41
  %v86 = vpack.c.b16 %v80, %v78
  %v87 = vpack.c.b16 %v81, %v79
  %v88 = vpack.c.b16 %v84, %v82
  %v89 = vpack.c.b16 %v85, %v83
  %vm94 = vcmask 261120
  %v96 = vsel %vm94, %v70, 0
  %v99 = vsel %vm94, %v71, 0
  %v102 = vsel %vm94, %v72, 0
  %v105 = vsel %vm94, %v73, 0
  %107 = vmatprep.subr.bf16.mxu0 %v87
  %108 = vmatpush1.bf16.msra.mxu0 %v86
  %109 = vmatprep.subr.bf16.mxu0 %v89
  %110 = vmatpush1.bf16.msra.mxu0 %v88
  %111 = vmatprep.subr.bf16.mxu0 0
  %112 = vmatpush1.bf16.msra.mxu0 0
  %113 = vmatprep.subr.bf16.mxu0 0
  %114 = vmatpush1.bf16.msra.mxu0 0
  %115 = vmatprep.subr.bf16.mxu0 0
  %116 = vmatpush1.bf16.msra.mxu0 0
  %117 = vmatprep.subr.bf16.mxu0 0
  %118 = vmatpush1.bf16.msra.mxu0 0
  %119 = vmatprep.subr.bf16.mxu0 0
  %120 = vmatpush1.bf16.msra.mxu0 0
  %121 = vmatprep.subr.bf16.mxu0 0
  %122 = vmatpush1.bf16.msra.mxu0 0
  %123 = vmatprep.subr.bf16.mxu0 0
  %124 = vmatpush1.bf16.msra.mxu0 0
  %125 = vmatprep.subr.bf16.mxu0 0
  %126 = vmatpush1.bf16.msra.mxu0 0
  %127 = vmatprep.subr.bf16.mxu0 0
  %128 = vmatpush1.bf16.msra.mxu0 0
  %129 = vmatprep.subr.bf16.mxu0 0
  %130 = vmatpush1.bf16.msra.mxu0 0
  %131 = vmatprep.subr.bf16.mxu0 0
  %132 = vmatpush1.bf16.msra.mxu0 0
  %133 = vmatprep.subr.bf16.mxu0 0
  %134 = vmatpush1.bf16.msra.mxu0 0
  %135 = vmatprep.subr.bf16.mxu0 0
  %136 = vmatpush1.bf16.msra.mxu0 0
  %137 = vmatprep.subr.bf16.mxu0 0
  %138 = vmatpush1.bf16.msra.mxu0 0
  %139 = vmatprep.mubr.bf16.mxu0 0
  %140 = vmatmul.mubr.bf16.gmra.mrb[0].mxu0 %v96
  %v141 = vpop.f32.mrb[0].mxu0
  %v142 = vadd.f32 %v47, %v141
  %v143 = vpop.f32.mrb[0].mxu0
  %v144 = vadd.f32 %v51, %v143
  %v145 = vpop.f32.mrb[0].mxu0
  %v146 = vadd.f32 %v47, %v145
  %v147 = vpop.f32.mrb[0].mxu0
  %v148 = vadd.f32 %v51, %v147
  %149 = vmatprep.mubr.bf16.mxu0 0
  %150 = vmatmul.mubr.bf16.gmra.mrb[0].mxu0 %v99
  %v151 = vpop.f32.mrb[0].mxu0
  %v152 = vadd.f32 %v47, %v151
  %v153 = vpop.f32.mrb[0].mxu0
  %v154 = vadd.f32 %v51, %v153
  %v155 = vpop.f32.mrb[0].mxu0
  %v156 = vadd.f32 %v47, %v155
  %v157 = vpop.f32.mrb[0].mxu0
  %v158 = vadd.f32 %v51, %v157
  %159 = vmatprep.mubr.bf16.mxu0 0
  %160 = vmatmul.mubr.bf16.gmra.mrb[0].mxu0 %v102
  %v161 = vpop.f32.mrb[0].mxu0
  %v162 = vadd.f32 %v47, %v161
  %v163 = vpop.f32.mrb[0].mxu0
  %v164 = vadd.f32 %v51, %v163
  %v165 = vpop.f32.mrb[0].mxu0
  %v166 = vadd.f32 %v47, %v165
  %v167 = vpop.f32.mrb[0].mxu0
  %v168 = vadd.f32 %v51, %v167
  %169 = vmatprep.mubr.bf16.mxu0 0
  %170 = vmatmul.mubr.bf16.gmra.mrb[0].mxu0 %v105
  %v171 = vpop.f32.mrb[0].mxu0
  %v172 = vadd.f32 %v47, %v171
  %v173 = vpop.f32.mrb[0].mxu0
  %v174 = vadd.f32 %v51, %v173
  %v175 = vpop.f32.mrb[0].mxu0
  %v176 = vadd.f32 %v47, %v175
  %v177 = vpop.f32.mrb[0].mxu0
  %v178 = vadd.f32 %v51, %v177
  %179 = vdwg.mxu0
  %180 = vst [vmem:[#allocation2] sm:$0xff] %v142
  %181 = vst [vmem:[#allocation2 + $0x8] sm:$0xff] %v144
  %182 = vst [vmem:[#allocation2 + $0x10] sm:$0xff] %v146
  %183 = vst [vmem:[#allocation2 + $0x18] sm:$0xff] %v148
  %184 = vst [vmem:[#allocation2 + $0x20] sm:$0xff] %v152
  %185 = vst [vmem:[#allocation2 + $0x28] sm:$0xff] %v154
  %186 = vst [vmem:[#allocation2 + $0x30] sm:$0xff] %v156
  %187 = vst [vmem:[#allocation2 + $0x38] sm:$0xff] %v158
  %188 = vst [vmem:[#allocation2 + $0x40] sm:$0xff] %v162
  %189 = vst [vmem:[#allocation2 + $0x48] sm:$0xff] %v164
  %190 = vst [vmem:[#allocation2 + $0x50] sm:$0xff] %v166
  %191 = vst [vmem:[#allocation2 + $0x58] sm:$0xff] %v168
  %192 = vst [vmem:[#allocation2 + $0x60] sm:$0xff] %v172
  %193 = vst [vmem:[#allocation2 + $0x68] sm:$0xff] %v174
  %194 = vst [vmem:[#allocation2 + $0x70] sm:$0xff] %v176
  %195 = vst [vmem:[#allocation2 + $0x78] sm:$0xff] %v178
  %v196 = vlaneseq
  %v197 = vand.u32 %v196, 127
  %v198 = vadd.s32 %v197, 128
  %vm199 = vcmp.ge.s32.totalorder %v197, 128
  %vm200 = vcmp.ge.s32.totalorder %v198, 128
  %vm201 = vcmp.lt.s32.totalorder %v197, 192
  %vm202 = vcmp.lt.s32.totalorder %v198, 192
  %vm203 = vmand %vm199, %vm201
  %vm204 = vmand %vm200, %vm202
  %v205 = vld [vmem:[%s3] sm:$0xff]
  %v206 = vld [vmem:[%s3 + $0x8] sm:$0xff]
  %v207 = vld [vmem:[%s3 + $0x10] sm:$0xff]
  %v208 = vld [vmem:[%s3 + $0x18] sm:$0xff]
  %v209 = vld [vmem:[%s3 + $0x20] sm:$0xff]
  %v210 = vld [vmem:[%s3 + $0x28] sm:$0xff]
  %v211 = vld [vmem:[%s3 + $0x30] sm:$0xff]
  %v212 = vld [vmem:[%s3 + $0x38] sm:$0xff]
  %v213 = vld [vmem:[%s5] sm:$0xff]
  %v214 = vld [vmem:[%s6] sm:$0xff]
  %v215 = vld [vmem:[%s1] sm:$0xff]
  %vm216 = vcmp.ne.f32.partialorder %v215, 0.0
  %v217 = vld [vmem:[#allocation2] sm:$0xff]
  %v218 = vld [vmem:[#allocation2 + $0x8] sm:$0xff]
  %v219 = vpack.c.bf16 %v213, %v213
  %v228 = vunpack.c.l.b16 %v205
  %v229 = vunpack.c.h.b16 %v205
  %v230 = vunpack.c.l.b16 %v206
  %v231 = vunpack.c.h.b16 %v206
  %v232 = vunpack.c.l.b16 %v207
  %v233 = vunpack.c.h.b16 %v207
  %v234 = vunpack.c.l.b16 %v208
  %v235 = vunpack.c.h.b16 %v208
  %v236 = vunpack.c.l.b16 %v209
  %v237 = vunpack.c.h.b16 %v209
  %v238 = vunpack.c.l.b16 %v210
  %v239 = vunpack.c.h.b16 %v210
  %v240 = vunpack.c.l.b16 %v211
  %v241 = vunpack.c.h.b16 %v211
  %v242 = vunpack.c.l.b16 %v212
  %v243 = vunpack.c.h.b16 %v212
  %v244 = vpack.c.b16 %v230, %v228
  %v245 = vpack.c.b16 %v231, %v229
  %v246 = vpack.c.b16 %v234, %v232
  %v247 = vpack.c.b16 %v235, %v233
  %v248 = vpack.c.b16 %v238, %v236
  %v249 = vpack.c.b16 %v239, %v237
  %v250 = vpack.c.b16 %v242, %v240
  %v251 = vpack.c.b16 %v243, %v241
  %vm260 = vcmask 523264
  %v262 = vsel %vm260, %v219, 0
  %264 = vmatprep.subr.bf16.mxu0 %v245
  %265 = vmatpush1.bf16.msra.mxu0 %v244
  %266 = vmatprep.subr.bf16.mxu0 %v247
  %267 = vmatpush1.bf16.msra.mxu0 %v246
  %268 = vmatprep.subr.bf16.mxu0 %v249
  %269 = vmatpush1.bf16.msra.mxu0 %v248
  %270 = vmatprep.subr.bf16.mxu0 %v251
  %271 = vmatpush1.bf16.msra.mxu0 %v250
  %272 = vmatprep.subr.bf16.mxu0 0
  %273 = vmatpush1.bf16.msra.mxu0 0
  %274 = vmatprep.subr.bf16.mxu0 0
  %275 = vmatpush1.bf16.msra.mxu0 0
  %276 = vmatprep.subr.bf16.mxu0 0
  %277 = vmatpush1.bf16.msra.mxu0 0
  %278 = vmatprep.subr.bf16.mxu0 0
  %279 = vmatpush1.bf16.msra.mxu0 0
  %280 = vmatprep.subr.bf16.mxu0 0
  %281 = vmatpush1.bf16.msra.mxu0 0
  %282 = vmatprep.subr.bf16.mxu0 0
  %283 = vmatpush1.bf16.msra.mxu0 0
  %284 = vmatprep.subr.bf16.mxu0 0
  %285 = vmatpush1.bf16.msra.mxu0 0
  %286 = vmatprep.subr.bf16.mxu0 0
  %287 = vmatpush1.bf16.msra.mxu0 0
  %288 = vmatprep.subr.bf16.mxu0 0
  %289 = vmatpush1.bf16.msra.mxu0 0
  %290 = vmatprep.subr.bf16.mxu0 0
  %291 = vmatpush1.bf16.msra.mxu0 0
  %292 = vmatprep.subr.bf16.mxu0 0
  %293 = vmatpush1.bf16.msra.mxu0 0
  %294 = vmatprep.subr.bf16.mxu0 0
  %295 = vmatpush1.bf16.msra.mxu0 0
  %296 = vmatprep.mubr.bf16.mxu0 0
  %297 = vmatmul.mubr.bf16.gmra.mrb[0].mxu0 %v262
  %v298 = vpop.f32.mrb[0].mxu0
  %v299 = vadd.f32 0.0, %v298
  %v300 = vpop.f32.mrb[0].mxu0
  %v301 = vadd.f32 0.0, %v300
  %v302 = vpop.f32.mrb[0].mxu0
  %v303 = vpop.f32.mrb[0].mxu0
  %304 = vdwg.mxu0
  %v305 = vadd.f32 %v217, %v299
  %v306 = vadd.f32 %v218, %v301
  %v307 = vtanh.pop %v305
  %v308 = vtanh.pop %v306
  %v309 = vxor.u32 %v305, 2147483648
  %v310 = vxor.u32 %v306, 2147483648
  %v311 = vmul.f32 %v309, 1.442695
  %v312 = vpow.pop %v311
  %v313 = vmul.f32 %v310, 1.442695
  %v314 = vpow.pop %v313
  %v315 = vadd.f32 %v312, 1.0
  %v316 = vadd.f32 %v314, 1.0
  %v317 = vrcp.pop %v315
  %v318 = vmul.f32 1.0, %v317
  %v319 = vrcp.pop %v316
  %v320 = vmul.f32 1.0, %v319
  %v321 = vsel %vm203, %v307, %v318
  %v322 = vsel %vm204, %v308, %v320
  %324 = vrot.lane.b32.xlu0 %v214, 64
  %v325 = vpop.permute.xlu0 %324
  %v327 = vmul.f32 %v321, %v325
  %v328 = vmul.f32 %v321, %v322
  %330 = vrot.lane.b32.xlu0 %v328, 64
  %v331 = vpop.permute.xlu0 %330
  %v333 = vadd.f32 %v327, %v331
  %v334 = vtanh.pop %v333
  %v335 = vmul.f32 %v322, %v334
  %337 = vrot.lane.b32.xlu0 %v335, 64
  %v338 = vpop.permute.xlu0 %337
  %v340 = vsel %vm216, %v338, 0.0
  %341 = vst.msk [vmem:[#allocation3] sm:$0xff] %vm94, %v340
  %343 = vrot.lane.b32.xlu0 %v340, 96
  %v344 = vpop.permute.xlu0 %343
  %s346 = scalar_lea.vmem [#allocation4], 56
  %347 = vst.msk [vmem:[%s346] sm:$0xff] %vm94, %v344
  %v348 = vsel %vm216, %v338, %v213
  %350 = vrot.lane.b32.xlu0 %v333, 64
  %v351 = vpop.permute.xlu0 %350
  %v353 = vsel %vm216, %v351, %v214
  %s354 = scalar_lea.vmem %s1, 8
  %v355 = vld [vmem:[%s354] sm:$0xff]
  %vm356 = vcmp.ne.f32.partialorder %v355, 0.0
  %s357 = scalar_lea.vmem [#allocation2], 16
  %v358 = vld [vmem:[%s357] sm:$0xff]
  %v359 = vld [vmem:[%s357 + $0x8] sm:$0xff]
  %v360 = vpack.c.bf16 %v348, %v348
  %v362 = vsel %vm260, %v360, 0
  %364 = vmatprep.subr.bf16.mxu0 %v245
  %365 = vmatpush1.bf16.msra.mxu0 %v244
  %366 = vmatprep.subr.bf16.mxu0 %v247
  %367 = vmatpush1.bf16.msra.mxu0 %v246
  %368 = vmatprep.subr.bf16.mxu0 %v249
  %369 = vmatpush1.bf16.msra.mxu0 %v248
  %370 = vmatprep.subr.bf16.mxu0 %v251
  %371 = vmatpush1.bf16.msra.mxu0 %v250
  %372 = vmatprep.subr.bf16.mxu0 0
  %373 = vmatpush1.bf16.msra.mxu0 0
  %374 = vmatprep.subr.bf16.mxu0 0
  %375 = vmatpush1.bf16.msra.mxu0 0
  %376 = vmatprep.subr.bf16.mxu0 0
  %377 = vmatpush1.bf16.msra.mxu0 0
  %378 = vmatprep.subr.bf16.mxu0 0
  %379 = vmatpush1.bf16.msra.mxu0 0
  %380 = vmatprep.subr.bf16.mxu0 0
  %381 = vmatpush1.bf16.msra.mxu0 0
  %382 = vmatprep.subr.bf16.mxu0 0
  %383 = vmatpush1.bf16.msra.mxu0 0
  %384 = vmatprep.subr.bf16.mxu0 0
  %385 = vmatpush1.bf16.msra.mxu0 0
  %386 = vmatprep.subr.bf16.mxu0 0
  %387 = vmatpush1.bf16.msra.mxu0 0
  %388 = vmatprep.subr.bf16.mxu0 0
  %389 = vmatpush1.bf16.msra.mxu0 0
  %390 = vmatprep.subr.bf16.mxu0 0
  %391 = vmatpush1.bf16.msra.mxu0 0
  %392 = vmatprep.subr.bf16.mxu0 0
  %393 = vmatpush1.bf16.msra.mxu0 0
  %394 = vmatprep.subr.bf16.mxu0 0
  %395 = vmatpush1.bf16.msra.mxu0 0
  %396 = vmatprep.mubr.bf16.mxu0 0
  %397 = vmatmul.mubr.bf16.gmra.mrb[0].mxu0 %v362
  %v398 = vpop.f32.mrb[0].mxu0
  %v399 = vadd.f32 0.0, %v398
  %v400 = vpop.f32.mrb[0].mxu0
  %v401 = vadd.f32 0.0, %v400
  %v402 = vpop.f32.mrb[0].mxu0
  %v403 = vpop.f32.mrb[0].mxu0
  %404 = vdwg.mxu0
  %v405 = vadd.f32 %v358, %v399
  %v406 = vadd.f32 %v359, %v401
  %v407 = vtanh.pop %v405
  %v408 = vtanh.pop %v406
  %v409 = vxor.u32 %v405, 2147483648
  %v410 = vxor.u32 %v406, 2147483648
  %v411 = vmul.f32 %v409, 1.442695
  %v412 = vpow.pop %v411
  %v413 = vmul.f32 %v410, 1.442695
  %v414 = vpow.pop %v413
  %v415 = vadd.f32 %v412, 1.0
  %v416 = vadd.f32 %v414, 1.0
  %v417 = vrcp.pop %v415
  %v418 = vmul.f32 1.0, %v417
  %v419 = vrcp.pop %v416
  %v420 = vmul.f32 1.0, %v419
  %v421 = vsel %vm203, %v407, %v418
  %v422 = vsel %vm204, %v408, %v420
  %424 = vrot.lane.b32.xlu0 %v353, 64
  %v425 = vpop.permute.xlu0 %424
  %v427 = vmul.f32 %v421, %v425
  %v428 = vmul.f32 %v421, %v422
  %430 = vrot.lane.b32.xlu0 %v428, 64
  %v431 = vpop.permute.xlu0 %430
  %v433 = vadd.f32 %v427, %v431
  %v434 = vtanh.pop %v433
  %v435 = vmul.f32 %v422, %v434
  %437 = vrot.lane.b32.xlu0 %v435, 64
  %v438 = vpop.permute.xlu0 %437
  %v440 = vsel %vm356, %v438, 0.0
  %s441 = scalar_lea.vmem [#allocation3], 8
  %442 = vst.msk [vmem:[%s441] sm:$0xff] %vm94, %v440
  %444 = vrot.lane.b32.xlu0 %v440, 96
  %v445 = vpop.permute.xlu0 %444
  %s447 = scalar_lea.vmem [#allocation4], 48
  %448 = vst.msk [vmem:[%s447] sm:$0xff] %vm94, %v445
  %v449 = vsel %vm356, %v438, %v348
  %451 = vrot.lane.b32.xlu0 %v433, 64
  %v452 = vpop.permute.xlu0 %451
  %v454 = vsel %vm356, %v452, %v353
  %s455 = scalar_lea.vmem %s1, 16
  %v456 = vld [vmem:[%s455] sm:$0xff]
  %vm457 = vcmp.ne.f32.partialorder %v456, 0.0
  %s458 = scalar_lea.vmem [#allocation2], 32
  %v459 = vld [vmem:[%s458] sm:$0xff]
  %v460 = vld [vmem:[%s458 + $0x8] sm:$0xff]
  %v461 = vpack.c.bf16 %v449, %v449
  %v463 = vsel %vm260, %v461, 0
  %465 = vmatprep.subr.bf16.mxu0 %v245
  %466 = vmatpush1.bf16.msra.mxu0 %v244
  %467 = vmatprep.subr.bf16.mxu0 %v247
  %468 = vmatpush1.bf16.msra.mxu0 %v246
  %469 = vmatprep.subr.bf16.mxu0 %v249
  %470 = vmatpush1.bf16.msra.mxu0 %v248
  %471 = vmatprep.subr.bf16.mxu0 %v251
  %472 = vmatpush1.bf16.msra.mxu0 %v250
  %473 = vmatprep.subr.bf16.mxu0 0
  %474 = vmatpush1.bf16.msra.mxu0 0
  %475 = vmatprep.subr.bf16.mxu0 0
  %476 = vmatpush1.bf16.msra.mxu0 0
  %477 = vmatprep.subr.bf16.mxu0 0
  %478 = vmatpush1.bf16.msra.mxu0 0
  %479 = vmatprep.subr.bf16.mxu0 0
  %480 = vmatpush1.bf16.msra.mxu0 0
  %481 = vmatprep.subr.bf16.mxu0 0
  %482 = vmatpush1.bf16.msra.mxu0 0
  %483 = vmatprep.subr.bf16.mxu0 0
  %484 = vmatpush1.bf16.msra.mxu0 0
  %485 = vmatprep.subr.bf16.mxu0 0
  %486 = vmatpush1.bf16.msra.mxu0 0
  %487 = vmatprep.subr.bf16.mxu0 0
  %488 = vmatpush1.bf16.msra.mxu0 0
  %489 = vmatprep.subr.bf16.mxu0 0
  %490 = vmatpush1.bf16.msra.mxu0 0
  %491 = vmatprep.subr.bf16.mxu0 0
  %492 = vmatpush1.bf16.msra.mxu0 0
  %493 = vmatprep.subr.bf16.mxu0 0
  %494 = vmatpush1.bf16.msra.mxu0 0
  %495 = vmatprep.subr.bf16.mxu0 0
  %496 = vmatpush1.bf16.msra.mxu0 0
  %497 = vmatprep.mubr.bf16.mxu0 0
  %498 = vmatmul.mubr.bf16.gmra.mrb[0].mxu0 %v463
  %v499 = vpop.f32.mrb[0].mxu0
  %v500 = vadd.f32 0.0, %v499
  %v501 = vpop.f32.mrb[0].mxu0
  %v502 = vadd.f32 0.0, %v501
  %v503 = vpop.f32.mrb[0].mxu0
  %v504 = vpop.f32.mrb[0].mxu0
  %505 = vdwg.mxu0
  %v506 = vadd.f32 %v459, %v500
  %v507 = vadd.f32 %v460, %v502
  %v508 = vtanh.pop %v506
  %v509 = vtanh.pop %v507
  %v510 = vxor.u32 %v506, 2147483648
  %v511 = vxor.u32 %v507, 2147483648
  %v512 = vmul.f32 %v510, 1.442695
  %v513 = vpow.pop %v512
  %v514 = vmul.f32 %v511, 1.442695
  %v515 = vpow.pop %v514
  %v516 = vadd.f32 %v513, 1.0
  %v517 = vadd.f32 %v515, 1.0
  %v518 = vrcp.pop %v516
  %v519 = vmul.f32 1.0, %v518
  %v520 = vrcp.pop %v517
  %v521 = vmul.f32 1.0, %v520
  %v522 = vsel %vm203, %v508, %v519
  %v523 = vsel %vm204, %v509, %v521
  %525 = vrot.lane.b32.xlu0 %v454, 64
  %v526 = vpop.permute.xlu0 %525
  %v528 = vmul.f32 %v522, %v526
  %v529 = vmul.f32 %v522, %v523
  %531 = vrot.lane.b32.xlu0 %v529, 64
  %v532 = vpop.permute.xlu0 %531
  %v534 = vadd.f32 %v528, %v532
  %v535 = vtanh.pop %v534
  %v536 = vmul.f32 %v523, %v535
  %538 = vrot.lane.b32.xlu0 %v536, 64
  %v539 = vpop.permute.xlu0 %538
  %v541 = vsel %vm457, %v539, 0.0
  %s542 = scalar_lea.vmem [#allocation3], 16
  %543 = vst.msk [vmem:[%s542] sm:$0xff] %vm94, %v541
  %545 = vrot.lane.b32.xlu0 %v541, 96
  %v546 = vpop.permute.xlu0 %545
  %s548 = scalar_lea.vmem [#allocation4], 40
  %549 = vst.msk [vmem:[%s548] sm:$0xff] %vm94, %v546
  %v550 = vsel %vm457, %v539, %v449
  %552 = vrot.lane.b32.xlu0 %v534, 64
  %v553 = vpop.permute.xlu0 %552
  %v555 = vsel %vm457, %v553, %v454
  %s556 = scalar_lea.vmem %s1, 24
  %v557 = vld [vmem:[%s556] sm:$0xff]
  %vm558 = vcmp.ne.f32.partialorder %v557, 0.0
  %s559 = scalar_lea.vmem [#allocation2], 48
  %v560 = vld [vmem:[%s559] sm:$0xff]
  %v561 = vld [vmem:[%s559 + $0x8] sm:$0xff]
  %v562 = vpack.c.bf16 %v550, %v550
  %v564 = vsel %vm260, %v562, 0
  %566 = vmatprep.subr.bf16.mxu0 %v245
  %567 = vmatpush1.bf16.msra.mxu0 %v244
  %568 = vmatprep.subr.bf16.mxu0 %v247
  %569 = vmatpush1.bf16.msra.mxu0 %v246
  %570 = vmatprep.subr.bf16.mxu0 %v249
  %571 = vmatpush1.bf16.msra.mxu0 %v248
  %572 = vmatprep.subr.bf16.mxu0 %v251
  %573 = vmatpush1.bf16.msra.mxu0 %v250
  %574 = vmatprep.subr.bf16.mxu0 0
  %575 = vmatpush1.bf16.msra.mxu0 0
  %576 = vmatprep.subr.bf16.mxu0 0
  %577 = vmatpush1.bf16.msra.mxu0 0
  %578 = vmatprep.subr.bf16.mxu0 0
  %579 = vmatpush1.bf16.msra.mxu0 0
  %580 = vmatprep.subr.bf16.mxu0 0
  %581 = vmatpush1.bf16.msra.mxu0 0
  %582 = vmatprep.subr.bf16.mxu0 0
  %583 = vmatpush1.bf16.msra.mxu0 0
  %584 = vmatprep.subr.bf16.mxu0 0
  %585 = vmatpush1.bf16.msra.mxu0 0
  %586 = vmatprep.subr.bf16.mxu0 0
  %587 = vmatpush1.bf16.msra.mxu0 0
  %588 = vmatprep.subr.bf16.mxu0 0
  %589 = vmatpush1.bf16.msra.mxu0 0
  %590 = vmatprep.subr.bf16.mxu0 0
  %591 = vmatpush1.bf16.msra.mxu0 0
  %592 = vmatprep.subr.bf16.mxu0 0
  %593 = vmatpush1.bf16.msra.mxu0 0
  %594 = vmatprep.subr.bf16.mxu0 0
  %595 = vmatpush1.bf16.msra.mxu0 0
  %596 = vmatprep.subr.bf16.mxu0 0
  %597 = vmatpush1.bf16.msra.mxu0 0
  %598 = vmatprep.mubr.bf16.mxu0 0
  %599 = vmatmul.mubr.bf16.gmra.mrb[0].mxu0 %v564
  %v600 = vpop.f32.mrb[0].mxu0
  %v601 = vadd.f32 0.0, %v600
  %v602 = vpop.f32.mrb[0].mxu0
  %v603 = vadd.f32 0.0, %v602
  %v604 = vpop.f32.mrb[0].mxu0
  %v605 = vpop.f32.mrb[0].mxu0
  %606 = vdwg.mxu0
  %v607 = vadd.f32 %v560, %v601
  %v608 = vadd.f32 %v561, %v603
  %v609 = vtanh.pop %v607
  %v610 = vtanh.pop %v608
  %v611 = vxor.u32 %v607, 2147483648
  %v612 = vxor.u32 %v608, 2147483648
  %v613 = vmul.f32 %v611, 1.442695
  %v614 = vpow.pop %v613
  %v615 = vmul.f32 %v612, 1.442695
  %v616 = vpow.pop %v615
  %v617 = vadd.f32 %v614, 1.0
  %v618 = vadd.f32 %v616, 1.0
  %v619 = vrcp.pop %v617
  %v620 = vmul.f32 1.0, %v619
  %v621 = vrcp.pop %v618
  %v622 = vmul.f32 1.0, %v621
  %v623 = vsel %vm203, %v609, %v620
  %v624 = vsel %vm204, %v610, %v622
  %626 = vrot.lane.b32.xlu0 %v555, 64
  %v627 = vpop.permute.xlu0 %626
  %v629 = vmul.f32 %v623, %v627
  %v630 = vmul.f32 %v623, %v624
  %632 = vrot.lane.b32.xlu0 %v630, 64
  %v633 = vpop.permute.xlu0 %632
  %v635 = vadd.f32 %v629, %v633
  %v636 = vtanh.pop %v635
  %v637 = vmul.f32 %v624, %v636
  %639 = vrot.lane.b32.xlu0 %v637, 64
  %v640 = vpop.permute.xlu0 %639
  %v642 = vsel %vm558, %v640, 0.0
  %s643 = scalar_lea.vmem [#allocation3], 24
  %644 = vst.msk [vmem:[%s643] sm:$0xff] %vm94, %v642
  %646 = vrot.lane.b32.xlu0 %v642, 96
  %v647 = vpop.permute.xlu0 %646
  %s649 = scalar_lea.vmem [#allocation4], 32
  %650 = vst.msk [vmem:[%s649] sm:$0xff] %vm94, %v647
  %v651 = vsel %vm558, %v640, %v550
  %653 = vrot.lane.b32.xlu0 %v635, 64
  %v654 = vpop.permute.xlu0 %653
  %v656 = vsel %vm558, %v654, %v555
  %s657 = scalar_lea.vmem %s1, 32
  %v658 = vld [vmem:[%s657] sm:$0xff]
  %vm659 = vcmp.ne.f32.partialorder %v658, 0.0
  %s660 = scalar_lea.vmem [#allocation2], 64
  %v661 = vld [vmem:[%s660] sm:$0xff]
  %v662 = vld [vmem:[%s660 + $0x8] sm:$0xff]
  %v663 = vpack.c.bf16 %v651, %v651
  %v665 = vsel %vm260, %v663, 0
  %667 = vmatprep.subr.bf16.mxu0 %v245
  %668 = vmatpush1.bf16.msra.mxu0 %v244
  %669 = vmatprep.subr.bf16.mxu0 %v247
  %670 = vmatpush1.bf16.msra.mxu0 %v246
  %671 = vmatprep.subr.bf16.mxu0 %v249
  %672 = vmatpush1.bf16.msra.mxu0 %v248
  %673 = vmatprep.subr.bf16.mxu0 %v251
  %674 = vmatpush1.bf16.msra.mxu0 %v250
  %675 = vmatprep.subr.bf16.mxu0 0
  %676 = vmatpush1.bf16.msra.mxu0 0
  %677 = vmatprep.subr.bf16.mxu0 0
  %678 = vmatpush1.bf16.msra.mxu0 0
  %679 = vmatprep.subr.bf16.mxu0 0
  %680 = vmatpush1.bf16.msra.mxu0 0
  %681 = vmatprep.subr.bf16.mxu0 0
  %682 = vmatpush1.bf16.msra.mxu0 0
  %683 = vmatprep.subr.bf16.mxu0 0
  %684 = vmatpush1.bf16.msra.mxu0 0
  %685 = vmatprep.subr.bf16.mxu0 0
  %686 = vmatpush1.bf16.msra.mxu0 0
  %687 = vmatprep.subr.bf16.mxu0 0
  %688 = vmatpush1.bf16.msra.mxu0 0
  %689 = vmatprep.subr.bf16.mxu0 0
  %690 = vmatpush1.bf16.msra.mxu0 0
  %691 = vmatprep.subr.bf16.mxu0 0
  %692 = vmatpush1.bf16.msra.mxu0 0
  %693 = vmatprep.subr.bf16.mxu0 0
  %694 = vmatpush1.bf16.msra.mxu0 0
  %695 = vmatprep.subr.bf16.mxu0 0
  %696 = vmatpush1.bf16.msra.mxu0 0
  %697 = vmatprep.subr.bf16.mxu0 0
  %698 = vmatpush1.bf16.msra.mxu0 0
  %699 = vmatprep.mubr.bf16.mxu0 0
  %700 = vmatmul.mubr.bf16.gmra.mrb[0].mxu0 %v665
  %v701 = vpop.f32.mrb[0].mxu0
  %v702 = vadd.f32 0.0, %v701
  %v703 = vpop.f32.mrb[0].mxu0
  %v704 = vadd.f32 0.0, %v703
  %v705 = vpop.f32.mrb[0].mxu0
  %v706 = vpop.f32.mrb[0].mxu0
  %707 = vdwg.mxu0
  %v708 = vadd.f32 %v661, %v702
  %v709 = vadd.f32 %v662, %v704
  %v710 = vtanh.pop %v708
  %v711 = vtanh.pop %v709
  %v712 = vxor.u32 %v708, 2147483648
  %v713 = vxor.u32 %v709, 2147483648
  %v714 = vmul.f32 %v712, 1.442695
  %v715 = vpow.pop %v714
  %v716 = vmul.f32 %v713, 1.442695
  %v717 = vpow.pop %v716
  %v718 = vadd.f32 %v715, 1.0
  %v719 = vadd.f32 %v717, 1.0
  %v720 = vrcp.pop %v718
  %v721 = vmul.f32 1.0, %v720
  %v722 = vrcp.pop %v719
  %v723 = vmul.f32 1.0, %v722
  %v724 = vsel %vm203, %v710, %v721
  %v725 = vsel %vm204, %v711, %v723
  %727 = vrot.lane.b32.xlu0 %v656, 64
  %v728 = vpop.permute.xlu0 %727
  %v730 = vmul.f32 %v724, %v728
  %v731 = vmul.f32 %v724, %v725
  %733 = vrot.lane.b32.xlu0 %v731, 64
  %v734 = vpop.permute.xlu0 %733
  %v736 = vadd.f32 %v730, %v734
  %v737 = vtanh.pop %v736
  %v738 = vmul.f32 %v725, %v737
  %740 = vrot.lane.b32.xlu0 %v738, 64
  %v741 = vpop.permute.xlu0 %740
  %v743 = vsel %vm659, %v741, 0.0
  %s744 = scalar_lea.vmem [#allocation3], 32
  %745 = vst.msk [vmem:[%s744] sm:$0xff] %vm94, %v743
  %747 = vrot.lane.b32.xlu0 %v743, 96
  %v748 = vpop.permute.xlu0 %747
  %s750 = scalar_lea.vmem [#allocation4], 24
  %751 = vst.msk [vmem:[%s750] sm:$0xff] %vm94, %v748
  %v752 = vsel %vm659, %v741, %v651
  %754 = vrot.lane.b32.xlu0 %v736, 64
  %v755 = vpop.permute.xlu0 %754
  %v757 = vsel %vm659, %v755, %v656
  %s758 = scalar_lea.vmem %s1, 40
  %v759 = vld [vmem:[%s758] sm:$0xff]
  %vm760 = vcmp.ne.f32.partialorder %v759, 0.0
  %s761 = scalar_lea.vmem [#allocation2], 80
  %v762 = vld [vmem:[%s761] sm:$0xff]
  %v763 = vld [vmem:[%s761 + $0x8] sm:$0xff]
  %v764 = vpack.c.bf16 %v752, %v752
  %v766 = vsel %vm260, %v764, 0
  %768 = vmatprep.subr.bf16.mxu0 %v245
  %769 = vmatpush1.bf16.msra.mxu0 %v244
  %770 = vmatprep.subr.bf16.mxu0 %v247
  %771 = vmatpush1.bf16.msra.mxu0 %v246
  %772 = vmatprep.subr.bf16.mxu0 %v249
  %773 = vmatpush1.bf16.msra.mxu0 %v248
  %774 = vmatprep.subr.bf16.mxu0 %v251
  %775 = vmatpush1.bf16.msra.mxu0 %v250
  %776 = vmatprep.subr.bf16.mxu0 0
  %777 = vmatpush1.bf16.msra.mxu0 0
  %778 = vmatprep.subr.bf16.mxu0 0
  %779 = vmatpush1.bf16.msra.mxu0 0
  %780 = vmatprep.subr.bf16.mxu0 0
  %781 = vmatpush1.bf16.msra.mxu0 0
  %782 = vmatprep.subr.bf16.mxu0 0
  %783 = vmatpush1.bf16.msra.mxu0 0
  %784 = vmatprep.subr.bf16.mxu0 0
  %785 = vmatpush1.bf16.msra.mxu0 0
  %786 = vmatprep.subr.bf16.mxu0 0
  %787 = vmatpush1.bf16.msra.mxu0 0
  %788 = vmatprep.subr.bf16.mxu0 0
  %789 = vmatpush1.bf16.msra.mxu0 0
  %790 = vmatprep.subr.bf16.mxu0 0
  %791 = vmatpush1.bf16.msra.mxu0 0
  %792 = vmatprep.subr.bf16.mxu0 0
  %793 = vmatpush1.bf16.msra.mxu0 0
  %794 = vmatprep.subr.bf16.mxu0 0
  %795 = vmatpush1.bf16.msra.mxu0 0
  %796 = vmatprep.subr.bf16.mxu0 0
  %797 = vmatpush1.bf16.msra.mxu0 0
  %798 = vmatprep.subr.bf16.mxu0 0
  %799 = vmatpush1.bf16.msra.mxu0 0
  %800 = vmatprep.mubr.bf16.mxu0 0
  %801 = vmatmul.mubr.bf16.gmra.mrb[0].mxu0 %v766
  %v802 = vpop.f32.mrb[0].mxu0
  %v803 = vadd.f32 0.0, %v802
  %v804 = vpop.f32.mrb[0].mxu0
  %v805 = vadd.f32 0.0, %v804
  %v806 = vpop.f32.mrb[0].mxu0
  %v807 = vpop.f32.mrb[0].mxu0
  %808 = vdwg.mxu0
  %v809 = vadd.f32 %v762, %v803
  %v810 = vadd.f32 %v763, %v805
  %v811 = vtanh.pop %v809
  %v812 = vtanh.pop %v810
  %v813 = vxor.u32 %v809, 2147483648
  %v814 = vxor.u32 %v810, 2147483648
  %v815 = vmul.f32 %v813, 1.442695
  %v816 = vpow.pop %v815
  %v817 = vmul.f32 %v814, 1.442695
  %v818 = vpow.pop %v817
  %v819 = vadd.f32 %v816, 1.0
  %v820 = vadd.f32 %v818, 1.0
  %v821 = vrcp.pop %v819
  %v822 = vmul.f32 1.0, %v821
  %v823 = vrcp.pop %v820
  %v824 = vmul.f32 1.0, %v823
  %v825 = vsel %vm203, %v811, %v822
  %v826 = vsel %vm204, %v812, %v824
  %828 = vrot.lane.b32.xlu0 %v757, 64
  %v829 = vpop.permute.xlu0 %828
  %v831 = vmul.f32 %v825, %v829
  %v832 = vmul.f32 %v825, %v826
  %834 = vrot.lane.b32.xlu0 %v832, 64
  %v835 = vpop.permute.xlu0 %834
  %v837 = vadd.f32 %v831, %v835
  %v838 = vtanh.pop %v837
  %v839 = vmul.f32 %v826, %v838
  %841 = vrot.lane.b32.xlu0 %v839, 64
  %v842 = vpop.permute.xlu0 %841
  %v844 = vsel %vm760, %v842, 0.0
  %s845 = scalar_lea.vmem [#allocation3], 40
  %846 = vst.msk [vmem:[%s845] sm:$0xff] %vm94, %v844
  %848 = vrot.lane.b32.xlu0 %v844, 96
  %v849 = vpop.permute.xlu0 %848
  %s851 = scalar_lea.vmem [#allocation4], 16
  %852 = vst.msk [vmem:[%s851] sm:$0xff] %vm94, %v849
  %v853 = vsel %vm760, %v842, %v752
  %855 = vrot.lane.b32.xlu0 %v837, 64
  %v856 = vpop.permute.xlu0 %855
  %v858 = vsel %vm760, %v856, %v757
  %s859 = scalar_lea.vmem %s1, 48
  %v860 = vld [vmem:[%s859] sm:$0xff]
  %vm861 = vcmp.ne.f32.partialorder %v860, 0.0
  %s862 = scalar_lea.vmem [#allocation2], 96
  %v863 = vld [vmem:[%s862] sm:$0xff]
  %v864 = vld [vmem:[%s862 + $0x8] sm:$0xff]
  %v865 = vpack.c.bf16 %v853, %v853
  %v867 = vsel %vm260, %v865, 0
  %869 = vmatprep.subr.bf16.mxu0 %v245
  %870 = vmatpush1.bf16.msra.mxu0 %v244
  %871 = vmatprep.subr.bf16.mxu0 %v247
  %872 = vmatpush1.bf16.msra.mxu0 %v246
  %873 = vmatprep.subr.bf16.mxu0 %v249
  %874 = vmatpush1.bf16.msra.mxu0 %v248
  %875 = vmatprep.subr.bf16.mxu0 %v251
  %876 = vmatpush1.bf16.msra.mxu0 %v250
  %877 = vmatprep.subr.bf16.mxu0 0
  %878 = vmatpush1.bf16.msra.mxu0 0
  %879 = vmatprep.subr.bf16.mxu0 0
  %880 = vmatpush1.bf16.msra.mxu0 0
  %881 = vmatprep.subr.bf16.mxu0 0
  %882 = vmatpush1.bf16.msra.mxu0 0
  %883 = vmatprep.subr.bf16.mxu0 0
  %884 = vmatpush1.bf16.msra.mxu0 0
  %885 = vmatprep.subr.bf16.mxu0 0
  %886 = vmatpush1.bf16.msra.mxu0 0
  %887 = vmatprep.subr.bf16.mxu0 0
  %888 = vmatpush1.bf16.msra.mxu0 0
  %889 = vmatprep.subr.bf16.mxu0 0
  %890 = vmatpush1.bf16.msra.mxu0 0
  %891 = vmatprep.subr.bf16.mxu0 0
  %892 = vmatpush1.bf16.msra.mxu0 0
  %893 = vmatprep.subr.bf16.mxu0 0
  %894 = vmatpush1.bf16.msra.mxu0 0
  %895 = vmatprep.subr.bf16.mxu0 0
  %896 = vmatpush1.bf16.msra.mxu0 0
  %897 = vmatprep.subr.bf16.mxu0 0
  %898 = vmatpush1.bf16.msra.mxu0 0
  %899 = vmatprep.subr.bf16.mxu0 0
  %900 = vmatpush1.bf16.msra.mxu0 0
  %901 = vmatprep.mubr.bf16.mxu0 0
  %902 = vmatmul.mubr.bf16.gmra.mrb[0].mxu0 %v867
  %v903 = vpop.f32.mrb[0].mxu0
  %v904 = vadd.f32 0.0, %v903
  %v905 = vpop.f32.mrb[0].mxu0
  %v906 = vadd.f32 0.0, %v905
  %v907 = vpop.f32.mrb[0].mxu0
  %v908 = vpop.f32.mrb[0].mxu0
  %909 = vdwg.mxu0
  %v910 = vadd.f32 %v863, %v904
  %v911 = vadd.f32 %v864, %v906
  %v912 = vtanh.pop %v910
  %v913 = vtanh.pop %v911
  %v914 = vxor.u32 %v910, 2147483648
  %v915 = vxor.u32 %v911, 2147483648
  %v916 = vmul.f32 %v914, 1.442695
  %v917 = vpow.pop %v916
  %v918 = vmul.f32 %v915, 1.442695
  %v919 = vpow.pop %v918
  %v920 = vadd.f32 %v917, 1.0
  %v921 = vadd.f32 %v919, 1.0
  %v922 = vrcp.pop %v920
  %v923 = vmul.f32 1.0, %v922
  %v924 = vrcp.pop %v921
  %v925 = vmul.f32 1.0, %v924
  %v926 = vsel %vm203, %v912, %v923
  %v927 = vsel %vm204, %v913, %v925
  %929 = vrot.lane.b32.xlu0 %v858, 64
  %v930 = vpop.permute.xlu0 %929
  %v932 = vmul.f32 %v926, %v930
  %v933 = vmul.f32 %v926, %v927
  %935 = vrot.lane.b32.xlu0 %v933, 64
  %v936 = vpop.permute.xlu0 %935
  %v938 = vadd.f32 %v932, %v936
  %v939 = vtanh.pop %v938
  %v940 = vmul.f32 %v927, %v939
  %942 = vrot.lane.b32.xlu0 %v940, 64
  %v943 = vpop.permute.xlu0 %942
  %v945 = vsel %vm861, %v943, 0.0
  %s946 = scalar_lea.vmem [#allocation3], 48
  %947 = vst.msk [vmem:[%s946] sm:$0xff] %vm94, %v945
  %949 = vrot.lane.b32.xlu0 %v945, 96
  %v950 = vpop.permute.xlu0 %949
  %s952 = scalar_lea.vmem [#allocation4], 8
  %953 = vst.msk [vmem:[%s952] sm:$0xff] %vm94, %v950
  %v954 = vsel %vm861, %v943, %v853
  %956 = vrot.lane.b32.xlu0 %v938, 64
  %v957 = vpop.permute.xlu0 %956
  %v959 = vsel %vm861, %v957, %v858
  %s960 = scalar_lea.vmem %s1, 56
  %v961 = vld [vmem:[%s960] sm:$0xff]
  %vm962 = vcmp.ne.f32.partialorder %v961, 0.0
  %s963 = scalar_lea.vmem [#allocation2], 112
  %v964 = vld [vmem:[%s963] sm:$0xff]
  %v965 = vld [vmem:[%s963 + $0x8] sm:$0xff]
  %v966 = vpack.c.bf16 %v954, %v954
  %v968 = vsel %vm260, %v966, 0
  %970 = vmatprep.subr.bf16.mxu0 %v245
  %971 = vmatpush1.bf16.msra.mxu0 %v244
  %972 = vmatprep.subr.bf16.mxu0 %v247
  %973 = vmatpush1.bf16.msra.mxu0 %v246
  %974 = vmatprep.subr.bf16.mxu0 %v249
  %975 = vmatpush1.bf16.msra.mxu0 %v248
  %976 = vmatprep.subr.bf16.mxu0 %v251
  %977 = vmatpush1.bf16.msra.mxu0 %v250
  %978 = vmatprep.subr.bf16.mxu0 0
  %979 = vmatpush1.bf16.msra.mxu0 0
  %980 = vmatprep.subr.bf16.mxu0 0
  %981 = vmatpush1.bf16.msra.mxu0 0
  %982 = vmatprep.subr.bf16.mxu0 0
  %983 = vmatpush1.bf16.msra.mxu0 0
  %984 = vmatprep.subr.bf16.mxu0 0
  %985 = vmatpush1.bf16.msra.mxu0 0
  %986 = vmatprep.subr.bf16.mxu0 0
  %987 = vmatpush1.bf16.msra.mxu0 0
  %988 = vmatprep.subr.bf16.mxu0 0
  %989 = vmatpush1.bf16.msra.mxu0 0
  %990 = vmatprep.subr.bf16.mxu0 0
  %991 = vmatpush1.bf16.msra.mxu0 0
  %992 = vmatprep.subr.bf16.mxu0 0
  %993 = vmatpush1.bf16.msra.mxu0 0
  %994 = vmatprep.subr.bf16.mxu0 0
  %995 = vmatpush1.bf16.msra.mxu0 0
  %996 = vmatprep.subr.bf16.mxu0 0
  %997 = vmatpush1.bf16.msra.mxu0 0
  %998 = vmatprep.subr.bf16.mxu0 0
  %999 = vmatpush1.bf16.msra.mxu0 0
  %1000 = vmatprep.subr.bf16.mxu0 0
  %1001 = vmatpush1.bf16.msra.mxu0 0
  %1002 = vmatprep.mubr.bf16.mxu0 0
  %1003 = vmatmul.mubr.bf16.gmra.mrb[0].mxu0 %v968
  %v1004 = vpop.f32.mrb[0].mxu0
  %v1005 = vadd.f32 0.0, %v1004
  %v1006 = vpop.f32.mrb[0].mxu0
  %v1007 = vadd.f32 0.0, %v1006
  %v1008 = vpop.f32.mrb[0].mxu0
  %v1009 = vpop.f32.mrb[0].mxu0
  %1010 = vdwg.mxu0
  %v1011 = vadd.f32 %v964, %v1005
  %v1012 = vadd.f32 %v965, %v1007
  %v1013 = vtanh.pop %v1011
  %v1014 = vtanh.pop %v1012
  %v1015 = vxor.u32 %v1011, 2147483648
  %v1016 = vxor.u32 %v1012, 2147483648
  %v1017 = vmul.f32 %v1015, 1.442695
  %v1018 = vpow.pop %v1017
  %v1019 = vmul.f32 %v1016, 1.442695
  %v1020 = vpow.pop %v1019
  %v1021 = vadd.f32 %v1018, 1.0
  %v1022 = vadd.f32 %v1020, 1.0
  %v1023 = vrcp.pop %v1021
  %v1024 = vmul.f32 1.0, %v1023
  %v1025 = vrcp.pop %v1022
  %v1026 = vmul.f32 1.0, %v1025
  %v1027 = vsel %vm203, %v1013, %v1024
  %v1028 = vsel %vm204, %v1014, %v1026
  %1030 = vrot.lane.b32.xlu0 %v959, 64
  %v1031 = vpop.permute.xlu0 %1030
  %v1033 = vmul.f32 %v1027, %v1031
  %v1034 = vmul.f32 %v1027, %v1028
  %1036 = vrot.lane.b32.xlu0 %v1034, 64
  %v1037 = vpop.permute.xlu0 %1036
  %v1039 = vadd.f32 %v1033, %v1037
  %v1040 = vtanh.pop %v1039
  %v1041 = vmul.f32 %v1028, %v1040
  %1043 = vrot.lane.b32.xlu0 %v1041, 64
  %v1044 = vpop.permute.xlu0 %1043
  %v1046 = vsel %vm962, %v1044, 0.0
  %s1047 = scalar_lea.vmem [#allocation3], 56
  %1048 = vst.msk [vmem:[%s1047] sm:$0xff] %vm94, %v1046
  %1050 = vrot.lane.b32.xlu0 %v1046, 96
  %v1051 = vpop.permute.xlu0 %1050
  %1053 = vst.msk [vmem:[#allocation4] sm:$0xff] %vm94, %v1051
  %v1054 = vsel %vm962, %v1044, %v954
  %1056 = vrot.lane.b32.xlu0 %v1039, 64
  %v1057 = vpop.permute.xlu0 %1056
  %v1059 = vsel %vm962, %v1057, %v959
  %1060 = vst.msk [vmem:[%s8] sm:$0xff] %vm94, %v1054
  %1062 = vrot.lane.b32.xlu0 %v1054, 96
  %v1063 = vpop.permute.xlu0 %1062
  %s1065 = scalar_lea.vmem %s8, 8
  %1066 = vst.msk [vmem:[%s1065] sm:$0xff] %vm94, %v1063
  %1067 = vst.msk [vmem:[%s9] sm:$0xff] %vm94, %v1059
  %1069 = vrot.lane.b32.xlu0 %v1059, 96
  %v1070 = vpop.permute.xlu0 %1069
  %s1072 = scalar_lea.vmem %s9, 8
  %1073 = vst.msk [vmem:[%s1072] sm:$0xff] %vm94, %v1070
  %v1074 = vld [vmem:[#allocation3] sm:$0xff]
  %v1075 = vld [vmem:[#allocation3 + $0x8] sm:$0xff]
  %v1076 = vld [vmem:[#allocation3 + $0x10] sm:$0xff]
  %v1077 = vld [vmem:[#allocation3 + $0x18] sm:$0xff]
  %v1078 = vld [vmem:[#allocation3 + $0x20] sm:$0xff]
  %v1079 = vld [vmem:[#allocation3 + $0x28] sm:$0xff]
  %v1080 = vld [vmem:[#allocation3 + $0x30] sm:$0xff]
  %v1081 = vld [vmem:[#allocation3 + $0x38] sm:$0xff]
  %v1082 = vld [vmem:[#allocation4] sm:$0xff]
  %v1083 = vld [vmem:[#allocation4 + $0x8] sm:$0xff]
  %v1084 = vld [vmem:[#allocation4 + $0x10] sm:$0xff]
  %v1085 = vld [vmem:[#allocation4 + $0x18] sm:$0xff]
  %v1086 = vld [vmem:[#allocation4 + $0x20] sm:$0xff]
  %v1087 = vld [vmem:[#allocation4 + $0x28] sm:$0xff]
  %v1088 = vld [vmem:[#allocation4 + $0x30] sm:$0xff]
  %v1089 = vld [vmem:[#allocation4 + $0x38] sm:$0xff]
  %v1090 = vadd.f32 %v1074, %v1082
  %v1091 = vadd.f32 %v1075, %v1083
  %v1092 = vadd.f32 %v1076, %v1084
  %v1093 = vadd.f32 %v1077, %v1085
  %v1094 = vadd.f32 %v1078, %v1086
  %v1095 = vadd.f32 %v1079, %v1087
  %v1096 = vadd.f32 %v1080, %v1088
  %v1097 = vadd.f32 %v1081, %v1089
  %1098 = vst.msk [vmem:[%s7] sm:$0xff] %vm94, %v1090
  %1099 = vst.msk [vmem:[%s7 + $0x8] sm:$0xff] %vm94, %v1091
  %1100 = vst.msk [vmem:[%s7 + $0x10] sm:$0xff] %vm94, %v1092
  %1101 = vst.msk [vmem:[%s7 + $0x18] sm:$0xff] %vm94, %v1093
  %1102 = vst.msk [vmem:[%s7 + $0x20] sm:$0xff] %vm94, %v1094
  %1103 = vst.msk [vmem:[%s7 + $0x28] sm:$0xff] %vm94, %v1095
  %1104 = vst.msk [vmem:[%s7 + $0x30] sm:$0xff] %vm94, %v1096
  %1105 = vst.msk [vmem:[%s7 + $0x38] sm:$0xff] %vm94, %v1097
  // Predicated region
  $region30: #{lstm_forward.1} parent=0 // pred_check
    _
  $region31: #{lstm_forward.1} parent=0 // pred_check_branch
    %1107 = sbr.rel (0) target = $region33
  $region32: #{lstm_forward.1} parent=0 // pred_region
    _
  $region33: #{lstm_forward.1} parent=0 // pred_fallthru
    _
  // Predicated region
  $region34: #{lstm_forward.1} parent=0 // pred_check
    _
  $region35: #{lstm_forward.1} parent=0 // pred_check_branch
    %1109 = sbr.rel (0) target = $region37
  $region36: #{lstm_forward.1} parent=0 // pred_region
    _
  $region37: #{lstm_forward.1} parent=0 // pred_fallthru
    _
  // Predicated region
  $region38: #{lstm_forward.1} parent=0 // pred_check
    _
  $region39: #{lstm_forward.1} parent=0 // pred_check_branch
    %1111 = sbr.rel (0) target = $region41
  $region40: #{lstm_forward.1} parent=0 // pred_region
    _
  $region41: #{lstm_forward.1} parent=0 // pred_fallthru
    _
  // Predicated region
  $region42: #{lstm_forward.1} parent=0 // pred_check
    _
  $region43: #{lstm_forward.1} parent=0 // pred_check_branch
    %1113 = sbr.rel (0) target = $region45
  $region44: #{lstm_forward.1} parent=0 // pred_region
    _
  $region45: #{lstm_forward.1} parent=0 // pred_fallthru
    _
  // Predicated region
  $region46: #{lstm_forward.1} parent=0 // pred_check
    _
  $region47: #{lstm_forward.1} parent=0 // pred_check_branch
    %1115 = sbr.rel (0) target = $region49
  $region48: #{lstm_forward.1} parent=0 // pred_region
    _
  $region49: #{lstm_forward.1} parent=0 // pred_fallthru
    _
  // Predicated region
  $region50: #{lstm_forward.1} parent=0 // pred_check
    _
  $region51: #{lstm_forward.1} parent=0 // pred_check_branch
    %1117 = sbr.rel (0) target = $region53
  $region52: #{lstm_forward.1} parent=0 // pred_region
    _
  $region53: #{lstm_forward.1} parent=0 // pred_fallthru
    _

</llo_original>
